<compile_context>
chip_gen: v6e
topology: v6e:2x2x1
jax: 0.10.0
libtpu: 0.0.40
codegen_flags: <defaults>
</compile_context>

<pallas_src>
import functools

import jax
import jax.numpy as jnp
from jax.experimental import pallas as pl
from jax.experimental.pallas import tpu as pltpu


# ---------------------------------------------------------------------------
# Kernel
# ---------------------------------------------------------------------------
def _transformer_kernel(b_block, n_seq, heads, dim_head, scale,
                        x_ref, vecs_ref, wqkv_ref, wo_ref, w1_ref, b1_ref, w2_ref,
                        o_ref):
    # grid = (batch_blocks, depth); axis 1 is the layer index.
    # o_ref is the carried activation for this batch block (resident across layers).
    @pl.when(pl.program_id(1) == 0)
    def _():
        o_ref[...] = x_ref[...]

    f32, bf16 = jnp.float32, jnp.bfloat16
    inner = heads * dim_head
    M = b_block * n_seq

    x = o_ref[...]                                   # (M, D) f32

    # packed per-layer vectors: rows = [ln1_w, ln1_b, bo, ln2_w, ln2_b, b2]
    ln1_w = vecs_ref[0, 0, :]
    ln1_b = vecs_ref[0, 1, :]
    bo    = vecs_ref[0, 2, :]
    ln2_w = vecs_ref[0, 3, :]
    ln2_b = vecs_ref[0, 4, :]
    b2    = vecs_ref[0, 5, :]
    b1    = b1_ref[0, 0, :]

    def layernorm(v, w, b, eps=1e-5):
        # two-pass variance (avoids E[x^2]-mu^2 cancellation); all f32 VPU work.
        mu = jnp.mean(v, axis=-1, keepdims=True)
        c = v - mu
        var = jnp.mean(c * c, axis=-1, keepdims=True)
        return c * jax.lax.rsqrt(var + eps) * w + b

    # ---------------- Residual(PreNorm(Attention)) ----------------
    xn = layernorm(x, ln1_w, ln1_b).astype(bf16)     # bf16 only at the MXU input
    # fused QKV: one (M, D) @ (D, 3*inner) bf16 matmul, f32 accumulation.
    qkv = jnp.dot(xn, wqkv_ref[0], preferred_element_type=f32)
    q = qkv[:, :inner] * scale                       # scale in f32 after the matmul
    k = qkv[:, inner:2 * inner]
    v = qkv[:, 2 * inner:]

    outs = []
    for h in range(heads):                           # static unroll: per-head score math
        lo = h * dim_head
        qh = q[:, lo:lo + dim_head].reshape(b_block, n_seq, dim_head).astype(bf16)
        kh = k[:, lo:lo + dim_head].reshape(b_block, n_seq, dim_head).astype(bf16)
        vh = v[:, lo:lo + dim_head].reshape(b_block, n_seq, dim_head).astype(bf16)
        # contract last axes directly (no materialized k transpose); f32 accumulation.
        dots = jnp.einsum('bqd,bkd->bqk', qh, kh, preferred_element_type=f32)
        dots = dots - jnp.max(dots, axis=-1, keepdims=True)
        p = jnp.exp(dots)
        p = p * pl.reciprocal(jnp.sum(p, axis=-1, keepdims=True), approx=True)
        # P@V with bf16 inputs (flash-style), f32 accumulation.
        oh = jnp.einsum('bqk,bkd->bqd', p.astype(bf16), vh, preferred_element_type=f32)
        outs.append(oh.reshape(M, dim_head))

    attn_cat = jnp.concatenate(outs, axis=-1).astype(bf16)   # (M, inner)
    proj = jnp.dot(attn_cat, wo_ref[0], preferred_element_type=f32) + bo
    x = x + proj

    # ---------------- Residual(PreNorm(FeedForward)) ----------------  (Dropout(p=0) -> id)
    xn2 = layernorm(x, ln2_w, ln2_b).astype(bf16)
    h1 = jnp.dot(xn2, w1_ref[0], preferred_element_type=f32) + b1
    # tanh-form GELU: runs on the EUP; matches torch's exact GELU to ~1e-4 at these magnitudes.
    h1 = 0.5 * h1 * (1.0 + jnp.tanh(0.7978845608028654 * (h1 + 0.044715 * h1 * h1 * h1)))
    h2 = jnp.dot(h1.astype(bf16), w2_ref[0], preferred_element_type=f32) + b2
    o_ref[...] = x + h2


# ---------------------------------------------------------------------------
# Tiling heuristics
# ---------------------------------------------------------------------------
def _auto_b_block(B, N, D, inner, mlp, heads, vmem_budget):
    """Largest batch tile (divisor of B, M = bb*N <= 1024) whose rough VMEM estimate fits."""
    # per-layer weights, bf16, double-buffered by the pipeline + packed f32 vectors
    w_bytes = 2 * 2 * (D * 3 * inner + inner * D + D * mlp + mlp * D) + 2 * 4 * (6 * D + mlp)
    best = 1
    for bb in range(1, B + 1):
        if B % bb:
            continue
        M = bb * N
        if bb != B and M % 8:
            continue                                  # keep block rows sublane-divisible
        act = 4 * 4 * M * D                           # x-in + out blocks, f32, double-buffered
        inter = 4 * M * (3 * inner + 2 * inner + mlp) + 4 * bb * heads * N * N
        if M <= 1024 and w_bytes + act + inter <= vmem_budget:
            best = bb
    return best


# ---------------------------------------------------------------------------
# Wrapper
# ---------------------------------------------------------------------------
def transformer_forward(x, params, *, heads, dim_head, b_block=None):
    B, N, D = x.shape
    depth = params['wq'].shape[0]
    inner = heads * dim_head
    mlp = params['w1'].shape[-1]
    scale = dim_head ** -0.5
    bf16 = jnp.bfloat16

    # VMEM budget: ~80% of physical per-TC VMEM, capped at 100 MiB
    # (-> ~100 MiB on v5e/v6e, ~51 MiB on v7x), with fallback if the query is unavailable.
    try:
        phys_vmem = pltpu.get_tpu_info().vmem_capacity_bytes
    except Exception:
        phys_vmem = 128 * 1024 * 1024
    vmem_limit = min(int(phys_vmem * 0.8), 100 * 1024 * 1024)

    if b_block is None:
        b_block = _auto_b_block(B, N, D, inner, mlp, heads, int(vmem_limit * 0.7))
    assert B % b_block == 0
    nb = B // b_block
    M = b_block * N

    # flatten (B, N) -> M so all projections are single wide 2-D matmuls
    x2 = x.reshape(B * N, D)

    # one-time trace-level transforms (outside the kernel):
    #   fuse q/k/v weights; pack the small per-layer vectors.
    wqkv = jnp.concatenate([params['wq'], params['wk'], params['wv']], axis=-1).astype(bf16)
    vecs = jnp.stack([params['ln1_w'], params['ln1_b'], params['bo'],
                      params['ln2_w'], params['ln2_b'], params['b2']],
                     axis=1)                          # (depth, 6, D) f32
    b1 = params['b1'][:, None, :]                     # (depth, 1, mlp) f32

    kernel = functools.partial(_transformer_kernel, b_block, N, heads, dim_head, scale)

    def per_layer(shape):
        return pl.BlockSpec((1,) + shape, lambda b, l: (l,) + (0,) * len(shape))

    grid_spec = pltpu.PrefetchScalarGridSpec(
        num_scalar_prefetch=0,
        grid=(nb, depth),                             # (batch blocks, layers)
        in_specs=[
            pl.BlockSpec((M, D), lambda b, l: (b, 0)),  # x2 (read only at layer 0)
            per_layer((6, D)),                        # packed ln1_w/ln1_b/bo/ln2_w/ln2_b/b2
            per_layer((D, 3 * inner)),                # fused wqkv (bf16)
            per_layer((inner, D)),                    # wo (bf16)
            per_layer((D, mlp)),                      # w1 (bf16)
            per_layer((1, mlp)),                      # b1 (f32)
            per_layer((mlp, D)),                      # w2 (bf16)
        ],
        out_specs=pl.BlockSpec((M, D), lambda b, l: (b, 0)),
    )

    out = pl.pallas_call(
        kernel,
        grid_spec=grid_spec,
        out_shape=jax.ShapeDtypeStruct((B * N, D), jnp.float32),
        compiler_params=pltpu.CompilerParams(
            dimension_semantics=("parallel", "arbitrary"),
            vmem_limit_bytes=vmem_limit),
    )(x2, vecs, wqkv, params['wo'].astype(bf16), params['w1'].astype(bf16), b1,
      params['w2'].astype(bf16))
    return out.reshape(B, N, D)


# ---------------------------------------------------------------------------
# Params + pure-JAX reference (mirrors the PyTorch forward, mask=None, dropout=0)
# ---------------------------------------------------------------------------
def init_params(key, depth, dim, heads, dim_head, mlp_dim):
    inner = heads * dim_head
    ks = jax.random.split(key, 8)

    def rnd(k, shape, scale=0.02):
        return scale * jax.random.normal(k, shape, dtype=jnp.float32)

    bf16 = jnp.bfloat16
    return dict(
        ln1_w=jnp.ones((depth, dim), jnp.float32),
        ln1_b=jnp.zeros((depth, dim), jnp.float32),
        # head-fused layouts, pre-transposed so the kernel does x @ W
        wq=rnd(ks[0], (depth, dim, inner)).astype(bf16),
        wk=rnd(ks[1], (depth, dim, inner)).astype(bf16),
        wv=rnd(ks[2], (depth, dim, inner)).astype(bf16),
        wo=rnd(ks[3], (depth, inner, dim)).astype(bf16),
        bo=rnd(ks[4], (depth, dim)),
        ln2_w=jnp.ones((depth, dim), jnp.float32),
        ln2_b=jnp.zeros((depth, dim), jnp.float32),
        w1=rnd(ks[5], (depth, dim, mlp_dim)).astype(bf16),
        b1=rnd(ks[6], (depth, mlp_dim)),
        w2=rnd(ks[7], (depth, mlp_dim, dim)).astype(bf16),
        b2=jnp.zeros((depth, dim), jnp.float32),
    )


def _layernorm_ref(x, w, b, eps=1e-5):
    mu = jnp.mean(x, axis=-1, keepdims=True)
    var = jnp.mean((x - mu) ** 2, axis=-1, keepdims=True)
    return (x - mu) * jax.lax.rsqrt(var + eps) * w + b


def transformer_ref(x, params, *, heads, dim_head):
    depth = params['wq'].shape[0]
    scale = dim_head ** -0.5
    f32 = jnp.float32
    B, N, _ = x.shape
    for l in range(depth):
        xn = _layernorm_ref(x, params['ln1_w'][l], params['ln1_b'][l])
        q = xn @ params['wq'][l].astype(f32)
        k = xn @ params['wk'][l].astype(f32)
        v = xn @ params['wv'][l].astype(f32)

        def split(t):
            return t.reshape(B, N, heads, dim_head).transpose(0, 2, 1, 3)

        qh, kh, vh = split(q), split(k), split(v)
        dots = jnp.einsum('bhid,bhjd->bhij', qh, kh) * scale
        attn = jax.nn.softmax(dots, axis=-1)
        out = jnp.einsum('bhij,bhjd->bhid', attn, vh)
        out = out.transpose(0, 2, 1, 3).reshape(B, N, heads * dim_head)
        x = x + out @ params['wo'][l].astype(f32) + params['bo'][l]

        xn2 = _layernorm_ref(x, params['ln2_w'][l], params['ln2_b'][l])
        h = jax.nn.gelu(xn2 @ params['w1'][l].astype(f32) + params['b1'][l],
                        approximate=False)
        x = x + h @ params['w2'][l].astype(f32) + params['b2'][l]
    return x


if __name__ == "__main__":
    # small but lane-dense shapes (D, heads*dim_head, mlp are multiples of 128)
    B, N, D = 2, 8, 128
    heads, dim_head, mlp_dim, depth = 4, 32, 256, 2

    key = jax.random.PRNGKey(0)
    kx, kp = jax.random.split(key)
    x = jax.random.normal(kx, (B, N, D), dtype=jnp.float32)
    params = init_params(kp, depth, D, heads, dim_head, mlp_dim)

    out = transformer_forward(x, params, heads=heads, dim_head=dim_head)
    out = jax.block_until_ready(out)

    ref = transformer_ref(x, params, heads=heads, dim_head=dim_head)
    assert out.shape == (B, N, D)
    err = float(jnp.max(jnp.abs(out - ref)))
    # bf16 MXU inputs (activations rounded at matmul inputs) add ~1e-3 vs the f32-activation ref.
    assert jnp.allclose(out, ref, atol=5e-3, rtol=5e-3), err
    print("KERNEL_OK")
</pallas_src>

<mosaic_0001>
module attributes {stable_mosaic.version = 11 : i64} {
  func.func @_transformer_kernel(%arg0: i32, %arg1: i32, %arg2: memref<16x128xf32, #tpu.memory_space<vmem>>, %arg3: memref<1x6x128xf32, #tpu.memory_space<vmem>>, %arg4: memref<1x128x384xbf16, #tpu.memory_space<vmem>>, %arg5: memref<1x128x128xbf16, #tpu.memory_space<vmem>>, %arg6: memref<1x128x256xbf16, #tpu.memory_space<vmem>>, %arg7: memref<1x1x256xf32, #tpu.memory_space<vmem>>, %arg8: memref<1x256x128xbf16, #tpu.memory_space<vmem>>, %arg9: memref<16x128xf32, #tpu.memory_space<vmem>>) attributes {dimension_semantics = [#tpu.dimension_semantics<parallel>, #tpu.dimension_semantics<arbitrary>], iteration_bounds = array<i64: 1, 2>, scalar_prefetch = 0 : i64, scratch_operands = 0 : i64, tpu.core_type = #tpu.core_type<tc>, window_params = [{transform_indices = @transform_0, window_bounds = array<i64: 16, 128>}, {transform_indices = @transform_1, window_bounds = array<i64: 1, 6, 128>}, {transform_indices = @transform_2, window_bounds = array<i64: 1, 128, 384>}, {transform_indices = @transform_3, window_bounds = array<i64: 1, 128, 128>}, {transform_indices = @transform_4, window_bounds = array<i64: 1, 128, 256>}, {transform_indices = @transform_5, window_bounds = array<i64: 1, 1, 256>}, {transform_indices = @transform_6, window_bounds = array<i64: 1, 256, 128>}, {transform_indices = @transform_7, window_bounds = array<i64: 16, 128>}]} {
    %c0_i32 = arith.constant 0 : i32
    %0 = arith.cmpi eq, %arg1, %c0_i32 : i32
    %1 = arith.extui %0 : i1 to i32
    %c0_i32_0 = arith.constant 0 : i32
    %2 = arith.cmpi ne, %1, %c0_i32_0 : i32
    scf.if %2 {
      %c0_66 = arith.constant 0 : index
      %c0_67 = arith.constant 0 : index
      %201 = vector.load %arg2[%c0_66, %c0_67] : memref<16x128xf32, #tpu.memory_space<vmem>>, vector<16x128xf32>
      %c0_68 = arith.constant 0 : index
      %c0_69 = arith.constant 0 : index
      %202 = vector.load %arg9[%c0_68, %c0_69] : memref<16x128xf32, #tpu.memory_space<vmem>>, vector<16x128xf32>
      tpu.vector_store %arg9[%c0_68, %c0_69], %201 {strides = array<i32>} : memref<16x128xf32, #tpu.memory_space<vmem>>, vector<16x128xf32>,
    } else {
    }
    %c0 = arith.constant 0 : index
    %c0_1 = arith.constant 0 : index
    %3 = vector.load %arg9[%c0, %c0_1] : memref<16x128xf32, #tpu.memory_space<vmem>>, vector<16x128xf32>
    %c0_2 = arith.constant 0 : index
    %c0_3 = arith.constant 0 : index
    %c0_4 = arith.constant 0 : index
    %4 = vector.load %arg3[%c0_2, %c0_3, %c0_4] : memref<1x6x128xf32, #tpu.memory_space<vmem>>, vector<1x1x128xf32>
    %5 = vector.shape_cast %4 : vector<1x1x128xf32> to vector<128xf32>
    %c0_5 = arith.constant 0 : index
    %c1 = arith.constant 1 : index
    %c0_6 = arith.constant 0 : index
    %6 = vector.load %arg3[%c0_5, %c1, %c0_6] : memref<1x6x128xf32, #tpu.memory_space<vmem>>, vector<1x1x128xf32>
    %7 = vector.shape_cast %6 : vector<1x1x128xf32> to vector<128xf32>
    %c0_7 = arith.constant 0 : index
    %c2 = arith.constant 2 : index
    %c0_8 = arith.constant 0 : index
    %8 = vector.load %arg3[%c0_7, %c2, %c0_8] : memref<1x6x128xf32, #tpu.memory_space<vmem>>, vector<1x1x128xf32>
    %9 = vector.shape_cast %8 : vector<1x1x128xf32> to vector<128xf32>
    %c0_9 = arith.constant 0 : index
    %c3 = arith.constant 3 : index
    %c0_10 = arith.constant 0 : index
    %10 = vector.load %arg3[%c0_9, %c3, %c0_10] : memref<1x6x128xf32, #tpu.memory_space<vmem>>, vector<1x1x128xf32>
    %11 = vector.shape_cast %10 : vector<1x1x128xf32> to vector<128xf32>
    %c0_11 = arith.constant 0 : index
    %c4 = arith.constant 4 : index
    %c0_12 = arith.constant 0 : index
    %12 = vector.load %arg3[%c0_11, %c4, %c0_12] : memref<1x6x128xf32, #tpu.memory_space<vmem>>, vector<1x1x128xf32>
    %13 = vector.shape_cast %12 : vector<1x1x128xf32> to vector<128xf32>
    %c0_13 = arith.constant 0 : index
    %c5 = arith.constant 5 : index
    %c0_14 = arith.constant 0 : index
    %14 = vector.load %arg3[%c0_13, %c5, %c0_14] : memref<1x6x128xf32, #tpu.memory_space<vmem>>, vector<1x1x128xf32>
    %15 = vector.shape_cast %14 : vector<1x1x128xf32> to vector<128xf32>
    %c0_15 = arith.constant 0 : index
    %c0_16 = arith.constant 0 : index
    %c0_17 = arith.constant 0 : index
    %16 = vector.load %arg7[%c0_15, %c0_16, %c0_17] : memref<1x1x256xf32, #tpu.memory_space<vmem>>, vector<1x1x256xf32>
    %17 = vector.shape_cast %16 : vector<1x1x256xf32> to vector<256xf32>
    %cst = arith.constant dense<0.000000e+00> : vector<16xf32>
    %18 = vector.multi_reduction <add>, %3, %cst [1] : vector<16x128xf32> to vector<16xf32>
    %19 = vector.shape_cast %18 : vector<16xf32> to vector<16x1xf32>
    %cst_18 = arith.constant 1.280000e+02 : f32
    %20 = vector.broadcast %cst_18 : f32 to vector<16x1xf32>
    %21 = arith.divf %19, %20 : vector<16x1xf32>
    %22 = vector.broadcast %21 : vector<16x1xf32> to vector<16x128xf32>
    %23 = arith.subf %3, %22 : vector<16x128xf32>
    %24 = arith.mulf %23, %23 : vector<16x128xf32>
    %cst_19 = arith.constant dense<0.000000e+00> : vector<16xf32>
    %25 = vector.multi_reduction <add>, %24, %cst_19 [1] : vector<16x128xf32> to vector<16xf32>
    %26 = vector.shape_cast %25 : vector<16xf32> to vector<16x1xf32>
    %cst_20 = arith.constant 1.280000e+02 : f32
    %27 = vector.broadcast %cst_20 : f32 to vector<16x1xf32>
    %28 = arith.divf %26, %27 : vector<16x1xf32>
    %cst_21 = arith.constant 9.99999974E-6 : f32
    %29 = vector.broadcast %cst_21 : f32 to vector<16x1xf32>
    %30 = arith.addf %28, %29 : vector<16x1xf32>
    %31 = math.rsqrt %30 : vector<16x1xf32>
    %32 = vector.broadcast %31 : vector<16x1xf32> to vector<16x128xf32>
    %33 = arith.mulf %23, %32 : vector<16x128xf32>
    %34 = vector.shape_cast %5 : vector<128xf32> to vector<1x128xf32>
    %35 = vector.broadcast %34 : vector<1x128xf32> to vector<16x128xf32>
    %36 = arith.mulf %33, %35 : vector<16x128xf32>
    %37 = vector.shape_cast %7 : vector<128xf32> to vector<1x128xf32>
    %38 = vector.broadcast %37 : vector<1x128xf32> to vector<16x128xf32>
    %39 = arith.addf %36, %38 : vector<16x128xf32>
    %40 = arith.truncf %39 : vector<16x128xf32> to vector<16x128xbf16>
    %c0_22 = arith.constant 0 : index
    %c0_23 = arith.constant 0 : index
    %c0_24 = arith.constant 0 : index
    %41 = vector.load %arg4[%c0_22, %c0_23, %c0_24] : memref<1x128x384xbf16, #tpu.memory_space<vmem>>, vector<1x128x384xbf16>
    %42 = vector.shape_cast %41 : vector<1x128x384xbf16> to vector<128x384xbf16>
    %cst_25 = arith.constant dense<0.000000e+00> : vector<16x384xf32>
    %43 = tpu.matmul %40, %42, %cst_25 {dimension_numbers = #tpu.dot_dimension_numbers<[1], [0], [0], [1], [0, 0, 1, 1], [], []>} : vector<16x128xbf16>, vector<128x384xbf16>, vector<16x384xf32> -> vector<16x384xf32>
    %44 = vector.extract_strided_slice %43 {offsets = [0, 0], sizes = [16, 128], strides = [1, 1]} : vector<16x384xf32> to vector<16x128xf32>
    %cst_26 = arith.constant 0.176776692 : f32
    %45 = vector.broadcast %cst_26 : f32 to vector<16x128xf32>
    %46 = arith.mulf %44, %45 : vector<16x128xf32>
    %47 = vector.extract_strided_slice %43 {offsets = [0, 128], sizes = [16, 128], strides = [1, 1]} : vector<16x384xf32> to vector<16x128xf32>
    %48 = vector.extract_strided_slice %43 {offsets = [0, 256], sizes = [16, 128], strides = [1, 1]} : vector<16x384xf32> to vector<16x128xf32>
    %49 = vector.extract_strided_slice %46 {offsets = [0, 0], sizes = [16, 32], strides = [1, 1]} : vector<16x128xf32> to vector<16x32xf32>
    %50 = vector.shape_cast %49 : vector<16x32xf32> to vector<2x8x32xf32>
    %51 = arith.truncf %50 : vector<2x8x32xf32> to vector<2x8x32xbf16>
    %52 = vector.extract_strided_slice %47 {offsets = [0, 0], sizes = [16, 32], strides = [1, 1]} : vector<16x128xf32> to vector<16x32xf32>
    %53 = vector.shape_cast %52 : vector<16x32xf32> to vector<2x8x32xf32>
    %54 = arith.truncf %53 : vector<2x8x32xf32> to vector<2x8x32xbf16>
    %55 = vector.extract_strided_slice %48 {offsets = [0, 0], sizes = [16, 32], strides = [1, 1]} : vector<16x128xf32> to vector<16x32xf32>
    %56 = vector.shape_cast %55 : vector<16x32xf32> to vector<2x8x32xf32>
    %57 = arith.truncf %56 : vector<2x8x32xf32> to vector<2x8x32xbf16>
    "tpu.trace_start"() <{level = 10 : i32, message = "bqd,bkd->bqk"}> : () -> ()
    %cst_27 = arith.constant dense<0.000000e+00> : vector<2x8x8xf32>
    %58 = tpu.matmul %51, %54, %cst_27 {dimension_numbers = #tpu.dot_dimension_numbers<[2], [2], [1], [1], [0, 0, 0, 1, 1, 1], [0], [0]>} : vector<2x8x32xbf16>, vector<2x8x32xbf16>, vector<2x8x8xf32> -> vector<2x8x8xf32>
    "tpu.trace_stop"() : () -> ()
    %cst_28 = arith.constant dense<0xFF800000> : vector<2x8xf32>
    %59 = vector.multi_reduction <maximumf>, %58, %cst_28 [2] : vector<2x8x8xf32> to vector<2x8xf32>
    %60 = vector.shape_cast %59 : vector<2x8xf32> to vector<2x8x1xf32>
    %61 = vector.broadcast %60 : vector<2x8x1xf32> to vector<2x8x8xf32>
    %62 = arith.subf %58, %61 : vector<2x8x8xf32>
    %63 = math.exp %62 : vector<2x8x8xf32>
    %cst_29 = arith.constant dense<0.000000e+00> : vector<2x8xf32>
    %64 = vector.multi_reduction <add>, %63, %cst_29 [2] : vector<2x8x8xf32> to vector<2x8xf32>
    %65 = vector.shape_cast %64 : vector<2x8xf32> to vector<2x8x1xf32>
    %66 = tpu.reciprocal %65 {approx = true} : vector<2x8x1xf32> -> vector<2x8x1xf32>
    %67 = vector.broadcast %66 : vector<2x8x1xf32> to vector<2x8x8xf32>
    %68 = arith.mulf %63, %67 : vector<2x8x8xf32>
    %69 = arith.truncf %68 : vector<2x8x8xf32> to vector<2x8x8xbf16>
    "tpu.trace_start"() <{level = 10 : i32, message = "bqk,bkd->bqd"}> : () -> ()
    %cst_30 = arith.constant dense<0.000000e+00> : vector<2x8x32xf32>
    %70 = tpu.matmul %69, %57, %cst_30 {dimension_numbers = #tpu.dot_dimension_numbers<[2], [1], [1], [2], [0, 0, 0, 1, 1, 2], [0], [0]>} : vector<2x8x8xbf16>, vector<2x8x32xbf16>, vector<2x8x32xf32> -> vector<2x8x32xf32>
    "tpu.trace_stop"() : () -> ()
    %71 = vector.shape_cast %70 : vector<2x8x32xf32> to vector<16x32xf32>
    %72 = vector.extract_strided_slice %46 {offsets = [0, 32], sizes = [16, 32], strides = [1, 1]} : vector<16x128xf32> to vector<16x32xf32>
    %73 = vector.shape_cast %72 : vector<16x32xf32> to vector<2x8x32xf32>
    %74 = arith.truncf %73 : vector<2x8x32xf32> to vector<2x8x32xbf16>
    %75 = vector.extract_strided_slice %47 {offsets = [0, 32], sizes = [16, 32], strides = [1, 1]} : vector<16x128xf32> to vector<16x32xf32>
    %76 = vector.shape_cast %75 : vector<16x32xf32> to vector<2x8x32xf32>
    %77 = arith.truncf %76 : vector<2x8x32xf32> to vector<2x8x32xbf16>
    %78 = vector.extract_strided_slice %48 {offsets = [0, 32], sizes = [16, 32], strides = [1, 1]} : vector<16x128xf32> to vector<16x32xf32>
    %79 = vector.shape_cast %78 : vector<16x32xf32> to vector<2x8x32xf32>
    %80 = arith.truncf %79 : vector<2x8x32xf32> to vector<2x8x32xbf16>
    "tpu.trace_start"() <{level = 10 : i32, message = "bqd,bkd->bqk"}> : () -> ()
    %cst_31 = arith.constant dense<0.000000e+00> : vector<2x8x8xf32>
    %81 = tpu.matmul %74, %77, %cst_31 {dimension_numbers = #tpu.dot_dimension_numbers<[2], [2], [1], [1], [0, 0, 0, 1, 1, 1], [0], [0]>} : vector<2x8x32xbf16>, vector<2x8x32xbf16>, vector<2x8x8xf32> -> vector<2x8x8xf32>
    "tpu.trace_stop"() : () -> ()
    %cst_32 = arith.constant dense<0xFF800000> : vector<2x8xf32>
    %82 = vector.multi_reduction <maximumf>, %81, %cst_32 [2] : vector<2x8x8xf32> to vector<2x8xf32>
    %83 = vector.shape_cast %82 : vector<2x8xf32> to vector<2x8x1xf32>
    %84 = vector.broadcast %83 : vector<2x8x1xf32> to vector<2x8x8xf32>
    %85 = arith.subf %81, %84 : vector<2x8x8xf32>
    %86 = math.exp %85 : vector<2x8x8xf32>
    %cst_33 = arith.constant dense<0.000000e+00> : vector<2x8xf32>
    %87 = vector.multi_reduction <add>, %86, %cst_33 [2] : vector<2x8x8xf32> to vector<2x8xf32>
    %88 = vector.shape_cast %87 : vector<2x8xf32> to vector<2x8x1xf32>
    %89 = tpu.reciprocal %88 {approx = true} : vector<2x8x1xf32> -> vector<2x8x1xf32>
    %90 = vector.broadcast %89 : vector<2x8x1xf32> to vector<2x8x8xf32>
    %91 = arith.mulf %86, %90 : vector<2x8x8xf32>
    %92 = arith.truncf %91 : vector<2x8x8xf32> to vector<2x8x8xbf16>
    "tpu.trace_start"() <{level = 10 : i32, message = "bqk,bkd->bqd"}> : () -> ()
    %cst_34 = arith.constant dense<0.000000e+00> : vector<2x8x32xf32>
    %93 = tpu.matmul %92, %80, %cst_34 {dimension_numbers = #tpu.dot_dimension_numbers<[2], [1], [1], [2], [0, 0, 0, 1, 1, 2], [0], [0]>} : vector<2x8x8xbf16>, vector<2x8x32xbf16>, vector<2x8x32xf32> -> vector<2x8x32xf32>
    "tpu.trace_stop"() : () -> ()
    %94 = vector.shape_cast %93 : vector<2x8x32xf32> to vector<16x32xf32>
    %95 = vector.extract_strided_slice %46 {offsets = [0, 64], sizes = [16, 32], strides = [1, 1]} : vector<16x128xf32> to vector<16x32xf32>
    %96 = vector.shape_cast %95 : vector<16x32xf32> to vector<2x8x32xf32>
    %97 = arith.truncf %96 : vector<2x8x32xf32> to vector<2x8x32xbf16>
    %98 = vector.extract_strided_slice %47 {offsets = [0, 64], sizes = [16, 32], strides = [1, 1]} : vector<16x128xf32> to vector<16x32xf32>
    %99 = vector.shape_cast %98 : vector<16x32xf32> to vector<2x8x32xf32>
    %100 = arith.truncf %99 : vector<2x8x32xf32> to vector<2x8x32xbf16>
    %101 = vector.extract_strided_slice %48 {offsets = [0, 64], sizes = [16, 32], strides = [1, 1]} : vector<16x128xf32> to vector<16x32xf32>
    %102 = vector.shape_cast %101 : vector<16x32xf32> to vector<2x8x32xf32>
    %103 = arith.truncf %102 : vector<2x8x32xf32> to vector<2x8x32xbf16>
    "tpu.trace_start"() <{level = 10 : i32, message = "bqd,bkd->bqk"}> : () -> ()
    %cst_35 = arith.constant dense<0.000000e+00> : vector<2x8x8xf32>
    %104 = tpu.matmul %97, %100, %cst_35 {dimension_numbers = #tpu.dot_dimension_numbers<[2], [2], [1], [1], [0, 0, 0, 1, 1, 1], [0], [0]>} : vector<2x8x32xbf16>, vector<2x8x32xbf16>, vector<2x8x8xf32> -> vector<2x8x8xf32>
    "tpu.trace_stop"() : () -> ()
    %cst_36 = arith.constant dense<0xFF800000> : vector<2x8xf32>
    %105 = vector.multi_reduction <maximumf>, %104, %cst_36 [2] : vector<2x8x8xf32> to vector<2x8xf32>
    %106 = vector.shape_cast %105 : vector<2x8xf32> to vector<2x8x1xf32>
    %107 = vector.broadcast %106 : vector<2x8x1xf32> to vector<2x8x8xf32>
    %108 = arith.subf %104, %107 : vector<2x8x8xf32>
    %109 = math.exp %108 : vector<2x8x8xf32>
    %cst_37 = arith.constant dense<0.000000e+00> : vector<2x8xf32>
    %110 = vector.multi_reduction <add>, %109, %cst_37 [2] : vector<2x8x8xf32> to vector<2x8xf32>
    %111 = vector.shape_cast %110 : vector<2x8xf32> to vector<2x8x1xf32>
    %112 = tpu.reciprocal %111 {approx = true} : vector<2x8x1xf32> -> vector<2x8x1xf32>
    %113 = vector.broadcast %112 : vector<2x8x1xf32> to vector<2x8x8xf32>
    %114 = arith.mulf %109, %113 : vector<2x8x8xf32>
    %115 = arith.truncf %114 : vector<2x8x8xf32> to vector<2x8x8xbf16>
    "tpu.trace_start"() <{level = 10 : i32, message = "bqk,bkd->bqd"}> : () -> ()
    %cst_38 = arith.constant dense<0.000000e+00> : vector<2x8x32xf32>
    %116 = tpu.matmul %115, %103, %cst_38 {dimension_numbers = #tpu.dot_dimension_numbers<[2], [1], [1], [2], [0, 0, 0, 1, 1, 2], [0], [0]>} : vector<2x8x8xbf16>, vector<2x8x32xbf16>, vector<2x8x32xf32> -> vector<2x8x32xf32>
    "tpu.trace_stop"() : () -> ()
    %117 = vector.shape_cast %116 : vector<2x8x32xf32> to vector<16x32xf32>
    %118 = vector.extract_strided_slice %46 {offsets = [0, 96], sizes = [16, 32], strides = [1, 1]} : vector<16x128xf32> to vector<16x32xf32>
    %119 = vector.shape_cast %118 : vector<16x32xf32> to vector<2x8x32xf32>
    %120 = arith.truncf %119 : vector<2x8x32xf32> to vector<2x8x32xbf16>
    %121 = vector.extract_strided_slice %47 {offsets = [0, 96], sizes = [16, 32], strides = [1, 1]} : vector<16x128xf32> to vector<16x32xf32>
    %122 = vector.shape_cast %121 : vector<16x32xf32> to vector<2x8x32xf32>
    %123 = arith.truncf %122 : vector<2x8x32xf32> to vector<2x8x32xbf16>
    %124 = vector.extract_strided_slice %48 {offsets = [0, 96], sizes = [16, 32], strides = [1, 1]} : vector<16x128xf32> to vector<16x32xf32>
    %125 = vector.shape_cast %124 : vector<16x32xf32> to vector<2x8x32xf32>
    %126 = arith.truncf %125 : vector<2x8x32xf32> to vector<2x8x32xbf16>
    "tpu.trace_start"() <{level = 10 : i32, message = "bqd,bkd->bqk"}> : () -> ()
    %cst_39 = arith.constant dense<0.000000e+00> : vector<2x8x8xf32>
    %127 = tpu.matmul %120, %123, %cst_39 {dimension_numbers = #tpu.dot_dimension_numbers<[2], [2], [1], [1], [0, 0, 0, 1, 1, 1], [0], [0]>} : vector<2x8x32xbf16>, vector<2x8x32xbf16>, vector<2x8x8xf32> -> vector<2x8x8xf32>
    "tpu.trace_stop"() : () -> ()
    %cst_40 = arith.constant dense<0xFF800000> : vector<2x8xf32>
    %128 = vector.multi_reduction <maximumf>, %127, %cst_40 [2] : vector<2x8x8xf32> to vector<2x8xf32>
    %129 = vector.shape_cast %128 : vector<2x8xf32> to vector<2x8x1xf32>
    %130 = vector.broadcast %129 : vector<2x8x1xf32> to vector<2x8x8xf32>
    %131 = arith.subf %127, %130 : vector<2x8x8xf32>
    %132 = math.exp %131 : vector<2x8x8xf32>
    %cst_41 = arith.constant dense<0.000000e+00> : vector<2x8xf32>
    %133 = vector.multi_reduction <add>, %132, %cst_41 [2] : vector<2x8x8xf32> to vector<2x8xf32>
    %134 = vector.shape_cast %133 : vector<2x8xf32> to vector<2x8x1xf32>
    %135 = tpu.reciprocal %134 {approx = true} : vector<2x8x1xf32> -> vector<2x8x1xf32>
    %136 = vector.broadcast %135 : vector<2x8x1xf32> to vector<2x8x8xf32>
    %137 = arith.mulf %132, %136 : vector<2x8x8xf32>
    %138 = arith.truncf %137 : vector<2x8x8xf32> to vector<2x8x8xbf16>
    "tpu.trace_start"() <{level = 10 : i32, message = "bqk,bkd->bqd"}> : () -> ()
    %cst_42 = arith.constant dense<0.000000e+00> : vector<2x8x32xf32>
    %139 = tpu.matmul %138, %126, %cst_42 {dimension_numbers = #tpu.dot_dimension_numbers<[2], [1], [1], [2], [0, 0, 0, 1, 1, 2], [0], [0]>} : vector<2x8x8xbf16>, vector<2x8x32xbf16>, vector<2x8x32xf32> -> vector<2x8x32xf32>
    "tpu.trace_stop"() : () -> ()
    %140 = vector.shape_cast %139 : vector<2x8x32xf32> to vector<16x32xf32>
    %141 = tpu.concatenate %71, %94, %117, %140 in 1 : vector<16x32xf32>, vector<16x32xf32>, vector<16x32xf32>, vector<16x32xf32> -> vector<16x128xf32>
    %142 = arith.truncf %141 : vector<16x128xf32> to vector<16x128xbf16>
    %c0_43 = arith.constant 0 : index
    %c0_44 = arith.constant 0 : index
    %c0_45 = arith.constant 0 : index
    %143 = vector.load %arg5[%c0_43, %c0_44, %c0_45] : memref<1x128x128xbf16, #tpu.memory_space<vmem>>, vector<1x128x128xbf16>
    %144 = vector.shape_cast %143 : vector<1x128x128xbf16> to vector<128x128xbf16>
    %cst_46 = arith.constant dense<0.000000e+00> : vector<16x128xf32>
    %145 = tpu.matmul %142, %144, %cst_46 {dimension_numbers = #tpu.dot_dimension_numbers<[1], [0], [0], [1], [0, 0, 1, 1], [], []>} : vector<16x128xbf16>, vector<128x128xbf16>, vector<16x128xf32> -> vector<16x128xf32>
    %146 = vector.shape_cast %9 : vector<128xf32> to vector<1x128xf32>
    %147 = vector.broadcast %146 : vector<1x128xf32> to vector<16x128xf32>
    %148 = arith.addf %145, %147 : vector<16x128xf32>
    %149 = arith.addf %3, %148 : vector<16x128xf32>
    %cst_47 = arith.constant dense<0.000000e+00> : vector<16xf32>
    %150 = vector.multi_reduction <add>, %149, %cst_47 [1] : vector<16x128xf32> to vector<16xf32>
    %151 = vector.shape_cast %150 : vector<16xf32> to vector<16x1xf32>
    %cst_48 = arith.constant 1.280000e+02 : f32
    %152 = vector.broadcast %cst_48 : f32 to vector<16x1xf32>
    %153 = arith.divf %151, %152 : vector<16x1xf32>
    %154 = vector.broadcast %153 : vector<16x1xf32> to vector<16x128xf32>
    %155 = arith.subf %149, %154 : vector<16x128xf32>
    %156 = arith.mulf %155, %155 : vector<16x128xf32>
    %cst_49 = arith.constant dense<0.000000e+00> : vector<16xf32>
    %157 = vector.multi_reduction <add>, %156, %cst_49 [1] : vector<16x128xf32> to vector<16xf32>
    %158 = vector.shape_cast %157 : vector<16xf32> to vector<16x1xf32>
    %cst_50 = arith.constant 1.280000e+02 : f32
    %159 = vector.broadcast %cst_50 : f32 to vector<16x1xf32>
    %160 = arith.divf %158, %159 : vector<16x1xf32>
    %cst_51 = arith.constant 9.99999974E-6 : f32
    %161 = vector.broadcast %cst_51 : f32 to vector<16x1xf32>
    %162 = arith.addf %160, %161 : vector<16x1xf32>
    %163 = math.rsqrt %162 : vector<16x1xf32>
    %164 = vector.broadcast %163 : vector<16x1xf32> to vector<16x128xf32>
    %165 = arith.mulf %155, %164 : vector<16x128xf32>
    %166 = vector.shape_cast %11 : vector<128xf32> to vector<1x128xf32>
    %167 = vector.broadcast %166 : vector<1x128xf32> to vector<16x128xf32>
    %168 = arith.mulf %165, %167 : vector<16x128xf32>
    %169 = vector.shape_cast %13 : vector<128xf32> to vector<1x128xf32>
    %170 = vector.broadcast %169 : vector<1x128xf32> to vector<16x128xf32>
    %171 = arith.addf %168, %170 : vector<16x128xf32>
    %172 = arith.truncf %171 : vector<16x128xf32> to vector<16x128xbf16>
    %c0_52 = arith.constant 0 : index
    %c0_53 = arith.constant 0 : index
    %c0_54 = arith.constant 0 : index
    %173 = vector.load %arg6[%c0_52, %c0_53, %c0_54] : memref<1x128x256xbf16, #tpu.memory_space<vmem>>, vector<1x128x256xbf16>
    %174 = vector.shape_cast %173 : vector<1x128x256xbf16> to vector<128x256xbf16>
    %cst_55 = arith.constant dense<0.000000e+00> : vector<16x256xf32>
    %175 = tpu.matmul %172, %174, %cst_55 {dimension_numbers = #tpu.dot_dimension_numbers<[1], [0], [0], [1], [0, 0, 1, 1], [], []>} : vector<16x128xbf16>, vector<128x256xbf16>, vector<16x256xf32> -> vector<16x256xf32>
    %176 = vector.shape_cast %17 : vector<256xf32> to vector<1x256xf32>
    %177 = vector.broadcast %176 : vector<1x256xf32> to vector<16x256xf32>
    %178 = arith.addf %175, %177 : vector<16x256xf32>
    %cst_56 = arith.constant 5.000000e-01 : f32
    %179 = vector.broadcast %cst_56 : f32 to vector<16x256xf32>
    %180 = arith.mulf %179, %178 : vector<16x256xf32>
    %cst_57 = arith.constant 4.471500e-02 : f32
    %181 = vector.broadcast %cst_57 : f32 to vector<16x256xf32>
    %182 = arith.mulf %181, %178 : vector<16x256xf32>
    %183 = arith.mulf %182, %178 : vector<16x256xf32>
    %184 = arith.mulf %183, %178 : vector<16x256xf32>
    %185 = arith.addf %178, %184 : vector<16x256xf32>
    %cst_58 = arith.constant 0.797884583 : f32
    %186 = vector.broadcast %cst_58 : f32 to vector<16x256xf32>
    %187 = arith.mulf %186, %185 : vector<16x256xf32>
    %188 = math.tanh %187 : vector<16x256xf32>
    %cst_59 = arith.constant 1.000000e+00 : f32
    %189 = vector.broadcast %cst_59 : f32 to vector<16x256xf32>
    %190 = arith.addf %189, %188 : vector<16x256xf32>
    %191 = arith.mulf %180, %190 : vector<16x256xf32>
    %192 = arith.truncf %191 : vector<16x256xf32> to vector<16x256xbf16>
    %c0_60 = arith.constant 0 : index
    %c0_61 = arith.constant 0 : index
    %c0_62 = arith.constant 0 : index
    %193 = vector.load %arg8[%c0_60, %c0_61, %c0_62] : memref<1x256x128xbf16, #tpu.memory_space<vmem>>, vector<1x256x128xbf16>
    %194 = vector.shape_cast %193 : vector<1x256x128xbf16> to vector<256x128xbf16>
    %cst_63 = arith.constant dense<0.000000e+00> : vector<16x128xf32>
    %195 = tpu.matmul %192, %194, %cst_63 {dimension_numbers = #tpu.dot_dimension_numbers<[1], [0], [0], [1], [0, 0, 1, 1], [], []>} : vector<16x256xbf16>, vector<256x128xbf16>, vector<16x128xf32> -> vector<16x128xf32>
    %196 = vector.shape_cast %15 : vector<128xf32> to vector<1x128xf32>
    %197 = vector.broadcast %196 : vector<1x128xf32> to vector<16x128xf32>
    %198 = arith.addf %195, %197 : vector<16x128xf32>
    %199 = arith.addf %149, %198 : vector<16x128xf32>
    %c0_64 = arith.constant 0 : index
    %c0_65 = arith.constant 0 : index
    %200 = vector.load %arg9[%c0_64, %c0_65] : memref<16x128xf32, #tpu.memory_space<vmem>>, vector<16x128xf32>
    tpu.vector_store %arg9[%c0_64, %c0_65], %199 {strides = array<i32>} : memref<16x128xf32, #tpu.memory_space<vmem>>, vector<16x128xf32>,
    return
  }
  func.func @transform_0(%arg0: i32, %arg1: i32) -> (i32, i32) {
    %c0_i32 = arith.constant 0 : i32
    %c0_i32_0 = arith.constant 0 : i32
    return %arg0, %c0_i32 : i32, i32
  }
  func.func @transform_1(%arg0: i32, %arg1: i32) -> (i32, i32, i32) {
    %c0_i32 = arith.constant 0 : i32
    %c0_i32_0 = arith.constant 0 : i32
    %c0_i32_1 = arith.constant 0 : i32
    return %arg1, %c0_i32, %c0_i32_0 : i32, i32, i32
  }
  func.func @transform_2(%arg0: i32, %arg1: i32) -> (i32, i32, i32) {
    %c0_i32 = arith.constant 0 : i32
    %c0_i32_0 = arith.constant 0 : i32
    %c0_i32_1 = arith.constant 0 : i32
    return %arg1, %c0_i32, %c0_i32_0 : i32, i32, i32
  }
  func.func @transform_3(%arg0: i32, %arg1: i32) -> (i32, i32, i32) {
    %c0_i32 = arith.constant 0 : i32
    %c0_i32_0 = arith.constant 0 : i32
    %c0_i32_1 = arith.constant 0 : i32
    return %arg1, %c0_i32, %c0_i32_0 : i32, i32, i32
  }
  func.func @transform_4(%arg0: i32, %arg1: i32) -> (i32, i32, i32) {
    %c0_i32 = arith.constant 0 : i32
    %c0_i32_0 = arith.constant 0 : i32
    %c0_i32_1 = arith.constant 0 : i32
    return %arg1, %c0_i32, %c0_i32_0 : i32, i32, i32
  }
  func.func @transform_5(%arg0: i32, %arg1: i32) -> (i32, i32, i32) {
    %c0_i32 = arith.constant 0 : i32
    %c0_i32_0 = arith.constant 0 : i32
    %c0_i32_1 = arith.constant 0 : i32
    return %arg1, %c0_i32, %c0_i32_0 : i32, i32, i32
  }
  func.func @transform_6(%arg0: i32, %arg1: i32) -> (i32, i32, i32) {
    %c0_i32 = arith.constant 0 : i32
    %c0_i32_0 = arith.constant 0 : i32
    %c0_i32_1 = arith.constant 0 : i32
    return %arg1, %c0_i32, %c0_i32_0 : i32, i32, i32
  }
  func.func @transform_7(%arg0: i32, %arg1: i32) -> (i32, i32) {
    %c0_i32 = arith.constant 0 : i32
    %c0_i32_0 = arith.constant 0 : i32
    return %arg0, %c0_i32 : i32, i32
  }
}

</mosaic_0001>

<llo_original>
// kernel: tpu_custom_call.1
$region0: #{tpu_custom_call.1}
  #allocation0 [shape = 'u32[]', space=smem, size = 0x4, offset = 0x4, fixed_abs, tag = 'smem constant byte address 0x4 - core index']
  #allocation1 [shape = 'u32[144,128]{1,0:T(1,128)}', space=vmem, size = 0x12000, scoped, tag = 'internal scratch']
  %s0 = inlined_call_operand.vmem [shape: f32[16,128], index: 0, kind: input, shape index: {}]
  %s1 = inlined_call_operand.vmem [shape: f32[2,6,128], index: 1, kind: input, shape index: {}]
  %s2 = inlined_call_operand.hbm [shape: bf16[2,128,384], index: 2, kind: input, shape index: {}]
  %s3 = inlined_call_operand.hbm [shape: bf16[2,128,128], index: 3, kind: input, shape index: {}]
  %s4 = inlined_call_operand.hbm [shape: bf16[2,128,256], index: 4, kind: input, shape index: {}]
  %s5 = inlined_call_operand.vmem [shape: f32[2,1,256], index: 5, kind: input, shape index: {}]
  %s6 = inlined_call_operand.hbm [shape: bf16[2,256,128], index: 6, kind: input, shape index: {}]
  %s7 = inlined_call_operand.hbm [shape: f32[16,128], index: 7, kind: output, shape index: {}]
  %s8 = sld [smem:[#allocation0]]
  $region81: #{tpu_custom_call.1} parent=0
    _
  %s10 = ssub.s32 1, %s8
  %s11 = scalar_select 0, %s10, %s8
  $region1: #{tpu_custom_call.1} parent=0
    #allocation2 [shape = 'u8[196608]{0}', space=vmem, size = 0x30000, scoped, tag = 'input window, operand 2']
    #allocation3 [shape = 's32[2]{0}', space=sflag, size = 0x8, scoped, tag = 'scoped memory for tpu_custom_call.1']
    #allocation4 [shape = 's32[2]{0}', space=sflag, size = 0x8, scoped, tag = 'scoped memory for tpu_custom_call.1']
    #allocation5 [shape = 'u8[65536]{0}', space=vmem, size = 0x10000, scoped, tag = 'input window, operand 3']
    #allocation6 [shape = 's32[2]{0}', space=sflag, size = 0x8, scoped, tag = 'scoped memory for tpu_custom_call.1']
    #allocation7 [shape = 'u8[131072]{0}', space=vmem, size = 0x20000, scoped, tag = 'input window, operand 4']
    #allocation8 [shape = 'u8[131072]{0}', space=vmem, size = 0x20000, scoped, tag = 'input window, operand 6']
    #allocation9 [shape = 's32[2]{0}', space=sflag, size = 0x8, scoped, tag = 'scoped memory for tpu_custom_call.1']
    #allocation10 [shape = 'u8[8192]{0}', space=vmem, size = 0x2000, scoped, tag = 'output window, operand 0, single buffered']
    %12 = vsyncpa [#allocation3], 0
    %s13 = scalar_lea.sflag [#allocation3], 1
    %14 = vsyncpa %s13, 0
    %15 = vsyncpa [#allocation6], 0
    %s16 = scalar_lea.sflag [#allocation6], 1
    %17 = vsyncpa %s16, 0
    %18 = vsyncpa [#allocation9], 0
    %s19 = scalar_lea.sflag [#allocation9], 1
    %20 = vsyncpa %s19, 0
    %21 = vsyncpa [#allocation4], 0
    loop: start=0, step=1, limit=4
    $region2: #{tpu_custom_call.1} parent=1 // loop_pre_header
      _
    $region3: #{tpu_custom_call.1} parent=1 // loop_header
      %s23 = sphi 0, %s27
      %p24 = scmp.ge.s32.totalorder %s23, 4
      %s30 = sphi 0, %s42
      %s31 = sphi 0, %s38
      %s32 = sphi 0, %s30
      %s33 = sphi 0, %s31
      %s34 = sphi 0, %s32
      %s35 = sphi 0, %s33
      %s45 = sphi 0, %s47
      %s48 = sphi 0, %s45
      %s49 = sphi 0, %s48
      %s65 = sphi 0, %s49
      %s71 = sphi 0, %s73
      %s74 = sphi 0, %s71
      %s75 = sphi 0, %s74
      %s91 = sphi 0, %s75
      %s97 = sphi 0, %s99
      %s100 = sphi 0, %s97
      %s101 = sphi 0, %s100
      %s117 = sphi 0, %s101
      %s123 = sphi 0, %s125
      %s126 = sphi 0, %s123
      %s127 = sphi 0, %s126
      %s143 = sphi 0, %s127
      %s149 = sphi 0, %s151
      %s152 = sphi 0, %s149
      %s153 = sphi 0, %s152
      %s169 = sphi 0, %s153
      %s175 = sphi 0, %s177
      %s178 = sphi 0, %s175
      %s179 = sphi 0, %s178
      %s195 = sphi 0, %s179
      %s201 = sphi 0, %s203
      %s204 = sphi 0, %s201
      %s205 = sphi 0, %s204
      %s221 = sphi 0, %s205
      %s227 = sphi 0, %s229
      %s230 = sphi 0, %s227
      %s231 = sphi 0, %s230
      %s247 = sphi 0, %s231
    $region4: #{tpu_custom_call.1} parent=1 // loop_header_branch
      %26 = sbr.rel (%p24) target = $region8
    $region5: #{tpu_custom_call.1} parent=1 // loop_body
      %s28 = ssub.s32 %s23, 1
      %s29 = ssub.s32 %s23, 2
      %s36 = sadd.s32 1, %s31
      %p37 = scmp.ge.s32.totalorder %s36, 2
      %s38 = scalar_select %p37, 0, %s36
      %s39 = sadd.s32 1, %s30
      %s40 = scalar_select %p37, %s39, %s30
      %p41 = scmp.ge.s32.totalorder %s40, 1
      %s42 = scalar_select %p41, 0, %s40
      %s43 = ssub.s32 %s30, %s42
      %p44 = scmp.eq.s32.totalorder %s43, 0
      %s46 = sadd.s32 %s45, 1
      %s47 = scalar_select %p44, %s45, %s46
      %p50 = pneg %p44
      %p51 = scmp.eq.s32.totalorder %s23, 1
      %p52 = por %p50, %p51
      %p53 = scmp.ne.s32.totalorder %s45, %s48
      %p54 = scmp.eq.s32.totalorder %s23, 0
      %p55 = por %p53, %p54
      %p56 = scmp.ne.s32.totalorder %s45, %s48
      %p57 = scmp.eq.s32.totalorder %s28, 1
      %p58 = por %p56, %p57
      %p59 = scmp.ne.s32.totalorder %s48, %s49
      %p60 = scmp.eq.s32.totalorder %s28, 0
      %p61 = por %p59, %p60
      %p62 = scmp.ne.s32.totalorder %s48, %s49
      %p63 = scmp.eq.s32.totalorder %s29, 1
      %p64 = por %p62, %p63
      %p66 = scmp.ne.s32.totalorder %s49, %s65
      %p67 = scmp.eq.s32.totalorder %s29, 0
      %p68 = por %p66, %p67
      %s69 = ssub.s32 %s31, %s38
      %p70 = scmp.eq.s32.totalorder %s69, 0
      %s72 = sadd.s32 %s71, 1
      %s73 = scalar_select %p70, %s71, %s72
      %p76 = pneg %p70
      %p77 = scmp.eq.s32.totalorder %s23, 1
      %p78 = por %p76, %p77
      %p79 = scmp.ne.s32.totalorder %s71, %s74
      %p80 = scmp.eq.s32.totalorder %s23, 0
      %p81 = por %p79, %p80
      %p82 = scmp.ne.s32.totalorder %s71, %s74
      %p83 = scmp.eq.s32.totalorder %s28, 1
      %p84 = por %p82, %p83
      %p85 = scmp.ne.s32.totalorder %s74, %s75
      %p86 = scmp.eq.s32.totalorder %s28, 0
      %p87 = por %p85, %p86
      %p88 = scmp.ne.s32.totalorder %s74, %s75
      %p89 = scmp.eq.s32.totalorder %s29, 1
      %p90 = por %p88, %p89
      %p92 = scmp.ne.s32.totalorder %s75, %s91
      %p93 = scmp.eq.s32.totalorder %s29, 0
      %p94 = por %p92, %p93
      %s95 = ssub.s32 %s31, %s38
      %p96 = scmp.eq.s32.totalorder %s95, 0
      %s98 = sadd.s32 %s97, 1
      %s99 = scalar_select %p96, %s97, %s98
      %p102 = pneg %p96
      %p103 = scmp.eq.s32.totalorder %s23, 1
      %p104 = por %p102, %p103
      %p105 = scmp.ne.s32.totalorder %s97, %s100
      %p106 = scmp.eq.s32.totalorder %s23, 0
      %p107 = por %p105, %p106
      %p108 = scmp.ne.s32.totalorder %s97, %s100
      %p109 = scmp.eq.s32.totalorder %s28, 1
      %p110 = por %p108, %p109
      %p111 = scmp.ne.s32.totalorder %s100, %s101
      %p112 = scmp.eq.s32.totalorder %s28, 0
      %p113 = por %p111, %p112
      %p114 = scmp.ne.s32.totalorder %s100, %s101
      %p115 = scmp.eq.s32.totalorder %s29, 1
      %p116 = por %p114, %p115
      %p118 = scmp.ne.s32.totalorder %s101, %s117
      %p119 = scmp.eq.s32.totalorder %s29, 0
      %p120 = por %p118, %p119
      %s121 = ssub.s32 %s31, %s38
      %p122 = scmp.eq.s32.totalorder %s121, 0
      %s124 = sadd.s32 %s123, 1
      %s125 = scalar_select %p122, %s123, %s124
      %p128 = pneg %p122
      %p129 = scmp.eq.s32.totalorder %s23, 1
      %p130 = por %p128, %p129
      %p131 = scmp.ne.s32.totalorder %s123, %s126
      %p132 = scmp.eq.s32.totalorder %s23, 0
      %p133 = por %p131, %p132
      %p134 = scmp.ne.s32.totalorder %s123, %s126
      %p135 = scmp.eq.s32.totalorder %s28, 1
      %p136 = por %p134, %p135
      %p137 = scmp.ne.s32.totalorder %s126, %s127
      %p138 = scmp.eq.s32.totalorder %s28, 0
      %p139 = por %p137, %p138
      %p140 = scmp.ne.s32.totalorder %s126, %s127
      %p141 = scmp.eq.s32.totalorder %s29, 1
      %p142 = por %p140, %p141
      %p144 = scmp.ne.s32.totalorder %s127, %s143
      %p145 = scmp.eq.s32.totalorder %s29, 0
      %p146 = por %p144, %p145
      %s147 = ssub.s32 %s31, %s38
      %p148 = scmp.eq.s32.totalorder %s147, 0
      %s150 = sadd.s32 %s149, 1
      %s151 = scalar_select %p148, %s149, %s150
      %p154 = pneg %p148
      %p155 = scmp.eq.s32.totalorder %s23, 1
      %p156 = por %p154, %p155
      %p157 = scmp.ne.s32.totalorder %s149, %s152
      %p158 = scmp.eq.s32.totalorder %s23, 0
      %p159 = por %p157, %p158
      %p160 = scmp.ne.s32.totalorder %s149, %s152
      %p161 = scmp.eq.s32.totalorder %s28, 1
      %p162 = por %p160, %p161
      %p163 = scmp.ne.s32.totalorder %s152, %s153
      %p164 = scmp.eq.s32.totalorder %s28, 0
      %p165 = por %p163, %p164
      %p166 = scmp.ne.s32.totalorder %s152, %s153
      %p167 = scmp.eq.s32.totalorder %s29, 1
      %p168 = por %p166, %p167
      %p170 = scmp.ne.s32.totalorder %s153, %s169
      %p171 = scmp.eq.s32.totalorder %s29, 0
      %p172 = por %p170, %p171
      %s173 = ssub.s32 %s31, %s38
      %p174 = scmp.eq.s32.totalorder %s173, 0
      %s176 = sadd.s32 %s175, 1
      %s177 = scalar_select %p174, %s175, %s176
      %p180 = pneg %p174
      %p181 = scmp.eq.s32.totalorder %s23, 1
      %p182 = por %p180, %p181
      %p183 = scmp.ne.s32.totalorder %s175, %s178
      %p184 = scmp.eq.s32.totalorder %s23, 0
      %p185 = por %p183, %p184
      %p186 = scmp.ne.s32.totalorder %s175, %s178
      %p187 = scmp.eq.s32.totalorder %s28, 1
      %p188 = por %p186, %p187
      %p189 = scmp.ne.s32.totalorder %s178, %s179
      %p190 = scmp.eq.s32.totalorder %s28, 0
      %p191 = por %p189, %p190
      %p192 = scmp.ne.s32.totalorder %s178, %s179
      %p193 = scmp.eq.s32.totalorder %s29, 1
      %p194 = por %p192, %p193
      %p196 = scmp.ne.s32.totalorder %s179, %s195
      %p197 = scmp.eq.s32.totalorder %s29, 0
      %p198 = por %p196, %p197
      %s199 = ssub.s32 %s31, %s38
      %p200 = scmp.eq.s32.totalorder %s199, 0
      %s202 = sadd.s32 %s201, 1
      %s203 = scalar_select %p200, %s201, %s202
      %p206 = pneg %p200
      %p207 = scmp.eq.s32.totalorder %s23, 1
      %p208 = por %p206, %p207
      %p209 = scmp.ne.s32.totalorder %s201, %s204
      %p210 = scmp.eq.s32.totalorder %s23, 0
      %p211 = por %p209, %p210
      %p212 = scmp.ne.s32.totalorder %s201, %s204
      %p213 = scmp.eq.s32.totalorder %s28, 1
      %p214 = por %p212, %p213
      %p215 = scmp.ne.s32.totalorder %s204, %s205
      %p216 = scmp.eq.s32.totalorder %s28, 0
      %p217 = por %p215, %p216
      %p218 = scmp.ne.s32.totalorder %s204, %s205
      %p219 = scmp.eq.s32.totalorder %s29, 1
      %p220 = por %p218, %p219
      %p222 = scmp.ne.s32.totalorder %s205, %s221
      %p223 = scmp.eq.s32.totalorder %s29, 0
      %p224 = por %p222, %p223
      %s225 = ssub.s32 %s30, %s42
      %p226 = scmp.eq.s32.totalorder %s225, 0
      %s228 = sadd.s32 %s227, 1
      %s229 = scalar_select %p226, %s227, %s228
      %p232 = pneg %p226
      %p233 = scmp.eq.s32.totalorder %s23, 1
      %p234 = por %p232, %p233
      %p235 = scmp.ne.s32.totalorder %s227, %s230
      %p236 = scmp.eq.s32.totalorder %s23, 0
      %p237 = por %p235, %p236
      %p238 = scmp.ne.s32.totalorder %s227, %s230
      %p239 = scmp.eq.s32.totalorder %s28, 1
      %p240 = por %p238, %p239
      %p241 = scmp.ne.s32.totalorder %s230, %s231
      %p242 = scmp.eq.s32.totalorder %s28, 0
      %p243 = por %p241, %p242
      %p244 = scmp.ne.s32.totalorder %s230, %s231
      %p245 = scmp.eq.s32.totalorder %s29, 1
      %p246 = por %p244, %p245
      %p248 = scmp.ne.s32.totalorder %s231, %s247
      %p249 = scmp.eq.s32.totalorder %s29, 0
      %p250 = por %p248, %p249
      %p251 = scmp.le.s32.totalorder 1, %s23
      %p252 = scmp.lt.s32.totalorder %s23, 3
      %p253 = pnand %p251, %p252
      %p254 = pneg %p253
      // Predicated region
      $region9: #{tpu_custom_call.1} parent=5 // pred_check
        _
      $region10: #{tpu_custom_call.1} parent=5 // pred_check_branch
        %256 = sbr.rel (%p253) target = $region12
      $region11: #{tpu_custom_call.1} parent=5 // pred_region
        %s257 = ssub.s32 %s23, 1
        // Predicated region
        $region13: #{tpu_custom_call.1} parent=11 // pred_check
          %p258 = pneg %p61
        $region14: #{tpu_custom_call.1} parent=11 // pred_check_branch
          %260 = sbr.rel (%p258) target = $region16
        $region15: #{tpu_custom_call.1} parent=11 // pred_region
          %s261 = smul.u32 2, %s32
          %p262 = scmp.lt.s32.totalorder %s261, 1
          %s263 = scalar_select %p262, %s261, 1
          %s264 = smul.addr %s263, 8
          %s265 = scalar_lea.vmem %s0, %s264
          %s266 = smul.u32 2, %s32
        $region16: #{tpu_custom_call.1} parent=11 // pred_fallthru
          _
      $region12: #{tpu_custom_call.1} parent=5 // pred_fallthru
        _
      %p267 = scmp.lt.s32.totalorder %s23, 2
      // Predicated region
      $region17: #{tpu_custom_call.1} parent=5 // pred_check
        %p268 = pneg %p267
      $region18: #{tpu_custom_call.1} parent=5 // pred_check_branch
        %270 = sbr.rel (%p268) target = $region20
      $region19: #{tpu_custom_call.1} parent=5 // pred_region
        // Predicated region
        $region21: #{tpu_custom_call.1} parent=19 // pred_check
          %p271 = pneg %p81
        $region22: #{tpu_custom_call.1} parent=19 // pred_check_branch
          %273 = sbr.rel (%p271) target = $region24
        $region23: #{tpu_custom_call.1} parent=19 // pred_region
          %p274 = scmp.lt.s32.totalorder %s31, 1
          %s275 = scalar_select %p274, %s31, 1
          %s276 = smul.addr %s275, 8
          %s277 = scalar_lea.vmem %s1, %s276
        $region24: #{tpu_custom_call.1} parent=19 // pred_fallthru
          _
        // Predicated region
        $region25: #{tpu_custom_call.1} parent=19 // pred_check
          %p278 = pneg %p107
        $region26: #{tpu_custom_call.1} parent=19 // pred_check_branch
          %280 = sbr.rel (%p278) target = $region28
        $region27: #{tpu_custom_call.1} parent=19 // pred_region
          %s281 = sand.u32 %s97, 1
          %s282 = scalar_lea.sflag [#allocation3], %s281
          %s283 = sand.u32 %s97, 1
          %s284 = smul.addr %s283, 192
          %s285 = scalar_lea.vmem [#allocation2], %s284
          %s287 = ssub.s32 3072, 3072
          %288 = vsyncadd %s282, %s287
          %s289 = smul.addr %s31, 48
          %s290 = smul.addr %s289, 64
          %s291 = scalar_lea.hbm %s2, %s290
          %s292 = sshll.u32 %s285, 4
          %s293 = int_to_ptr.vmem [resolvable:$true] %s292
          %298 = dma.hbm_to_vmem [thread:$0]  %s291, 3072, %s293, %s282, 192, 192, 12
        $region28: #{tpu_custom_call.1} parent=19 // pred_fallthru
          _
        // Predicated region
        $region29: #{tpu_custom_call.1} parent=19 // pred_check
          %p299 = pneg %p133
        $region30: #{tpu_custom_call.1} parent=19 // pred_check_branch
          %301 = sbr.rel (%p299) target = $region32
        $region31: #{tpu_custom_call.1} parent=19 // pred_region
          %s302 = sand.u32 %s23, 1
          %s303 = scalar_lea.sflag [#allocation6], %s302
          %s304 = sand.u32 %s123, 1
          %s305 = smul.addr %s304, 64
          %s306 = scalar_lea.vmem [#allocation5], %s305
          %s308 = ssub.s32 1024, 1024
          %309 = vsyncadd %s303, %s308
          %s310 = smul.addr %s31, 16
          %s311 = smul.addr %s310, 64
          %s312 = scalar_lea.hbm %s3, %s311
          %s313 = sshll.u32 %s306, 4
          %s314 = int_to_ptr.vmem [resolvable:$true] %s313
          %319 = dma.hbm_to_vmem [thread:$0]  %s312, 1024, %s314, %s303, 64, 64, 4
        $region32: #{tpu_custom_call.1} parent=19 // pred_fallthru
          _
        // Predicated region
        $region33: #{tpu_custom_call.1} parent=19 // pred_check
          %p320 = pneg %p159
        $region34: #{tpu_custom_call.1} parent=19 // pred_check_branch
          %322 = sbr.rel (%p320) target = $region36
        $region35: #{tpu_custom_call.1} parent=19 // pred_region
          %s323 = sand.u32 %s23, 1
          %s324 = scalar_lea.sflag [#allocation6], %s323
          %s325 = sand.u32 %s149, 1
          %s326 = smul.addr %s325, 128
          %s327 = scalar_lea.vmem [#allocation7], %s326
          %s329 = ssub.s32 2048, 2048
          %330 = vsyncadd %s324, %s329
          %s331 = smul.addr %s31, 32
          %s332 = smul.addr %s331, 64
          %s333 = scalar_lea.hbm %s4, %s332
          %s334 = sshll.u32 %s327, 4
          %s335 = int_to_ptr.vmem [resolvable:$true] %s334
          %340 = dma.hbm_to_vmem [thread:$0]  %s333, 2048, %s335, %s324, 128, 128, 8
        $region36: #{tpu_custom_call.1} parent=19 // pred_fallthru
          _
        // Predicated region
        $region37: #{tpu_custom_call.1} parent=19 // pred_check
          %p341 = pneg %p185
        $region38: #{tpu_custom_call.1} parent=19 // pred_check_branch
          %343 = sbr.rel (%p341) target = $region40
        $region39: #{tpu_custom_call.1} parent=19 // pred_region
          %p344 = scmp.lt.s32.totalorder %s31, 1
          %s345 = scalar_select %p344, %s31, 1
          %s346 = smul.addr %s345, 2
          %s347 = scalar_lea.vmem %s5, %s346
        $region40: #{tpu_custom_call.1} parent=19 // pred_fallthru
          _
        // Predicated region
        $region41: #{tpu_custom_call.1} parent=19 // pred_check
          %p348 = pneg %p211
        $region42: #{tpu_custom_call.1} parent=19 // pred_check_branch
          %350 = sbr.rel (%p348) target = $region44
        $region43: #{tpu_custom_call.1} parent=19 // pred_region
          %s351 = sand.u32 %s201, 1
          %s352 = scalar_lea.sflag [#allocation9], %s351
          %s353 = sand.u32 %s201, 1
          %s354 = smul.addr %s353, 128
          %s355 = scalar_lea.vmem [#allocation8], %s354
          %s357 = ssub.s32 2048, 2048
          %358 = vsyncadd %s352, %s357
          %s359 = smul.addr %s31, 32
          %s360 = smul.addr %s359, 64
          %s361 = scalar_lea.hbm %s6, %s360
          %s362 = sshll.u32 %s355, 4
          %s363 = int_to_ptr.vmem [resolvable:$true] %s362
          %368 = dma.hbm_to_vmem [thread:$0]  %s361, 2048, %s363, %s352, 64, 64, 4
        $region44: #{tpu_custom_call.1} parent=19 // pred_fallthru
          _
      $region20: #{tpu_custom_call.1} parent=5 // pred_fallthru
        _
      %p369 = scmp.le.s32.totalorder 1, %s23
      %p370 = scmp.lt.s32.totalorder %s23, 3
      %p371 = pnand %p369, %p370
      %p372 = pneg %p371
      // Predicated region
      $region45: #{tpu_custom_call.1} parent=5 // pred_check
        _
      $region46: #{tpu_custom_call.1} parent=5 // pred_check_branch
        %374 = sbr.rel (%p371) target = $region48
      $region47: #{tpu_custom_call.1} parent=5 // pred_region
        %s375 = ssub.s32 %s23, 1
        %s376 = sand.u32 %s100, 1
        %s377 = scalar_lea.sflag [#allocation3], %s376
        %s378 = sand.u32 %s100, 1
        %s379 = smul.addr %s378, 192
        %s380 = scalar_lea.vmem [#allocation2], %s379
        // Predicated region
        $region49: #{tpu_custom_call.1} parent=47 // pred_check
          %p381 = pneg %p113
        $region50: #{tpu_custom_call.1} parent=47 // pred_check_branch
          %383 = sbr.rel (%p381) target = $region52
        $region51: #{tpu_custom_call.1} parent=47 // pred_region
          %384 = dma.done %s377, 3072
        $region52: #{tpu_custom_call.1} parent=47 // pred_fallthru
          _
        %s385 = sand.u32 %s28, 1
        %s386 = scalar_lea.sflag [#allocation6], %s385
        %s387 = sand.u32 %s126, 1
        %s388 = smul.addr %s387, 64
        %s389 = scalar_lea.vmem [#allocation5], %s388
        // Predicated region
        $region53: #{tpu_custom_call.1} parent=47 // pred_check
          %p390 = pneg %p139
        $region54: #{tpu_custom_call.1} parent=47 // pred_check_branch
          %392 = sbr.rel (%p390) target = $region56
        $region55: #{tpu_custom_call.1} parent=47 // pred_region
          %393 = dma.done %s386, 1024
        $region56: #{tpu_custom_call.1} parent=47 // pred_fallthru
          _
        %s394 = sand.u32 %s28, 1
        %s395 = scalar_lea.sflag [#allocation6], %s394
        %s396 = sand.u32 %s152, 1
        %s397 = smul.addr %s396, 128
        %s398 = scalar_lea.vmem [#allocation7], %s397
        // Predicated region
        $region57: #{tpu_custom_call.1} parent=47 // pred_check
          %p399 = pneg %p165
        $region58: #{tpu_custom_call.1} parent=47 // pred_check_branch
          %401 = sbr.rel (%p399) target = $region60
        $region59: #{tpu_custom_call.1} parent=47 // pred_region
          %402 = dma.done %s395, 2048
        $region60: #{tpu_custom_call.1} parent=47 // pred_fallthru
          _
        %s403 = sand.u32 %s204, 1
        %s404 = scalar_lea.sflag [#allocation9], %s403
        %s405 = sand.u32 %s204, 1
        %s406 = smul.addr %s405, 128
        %s407 = scalar_lea.vmem [#allocation8], %s406
        // Predicated region
        $region61: #{tpu_custom_call.1} parent=47 // pred_check
          %p408 = pneg %p217
        $region62: #{tpu_custom_call.1} parent=47 // pred_check_branch
          %410 = sbr.rel (%p408) target = $region64
        $region63: #{tpu_custom_call.1} parent=47 // pred_region
          %411 = dma.done %s404, 2048
        $region64: #{tpu_custom_call.1} parent=47 // pred_fallthru
          _
        %s412 = smul.u32 2, %s32
        %p413 = scmp.lt.s32.totalorder %s412, 1
        %s414 = scalar_select %p413, %s412, 1
        %s415 = smul.addr %s414, 8
        %s416 = scalar_lea.vmem %s0, %s415
        %p417 = pneg %p61
        %p418 = pneg %p58
        %p419 = scmp.lt.s32.totalorder %s33, 1
        %s420 = scalar_select %p419, %s33, 1
        %s421 = smul.addr %s420, 8
        %s422 = scalar_lea.vmem %s1, %s421
        %p423 = pneg %p87
        %p424 = pneg %p84
        %s425 = sand.u32 %s100, 1
        %s426 = scalar_lea.sflag [#allocation3], %s425
        %s427 = sand.u32 %s100, 1
        %s428 = smul.addr %s427, 192
        %s429 = scalar_lea.vmem [#allocation2], %s428
        %p430 = pneg %p113
        %p431 = pneg %p110
        %s432 = sand.u32 %s28, 1
        %s433 = scalar_lea.sflag [#allocation6], %s432
        %s434 = sand.u32 %s126, 1
        %s435 = smul.addr %s434, 64
        %s436 = scalar_lea.vmem [#allocation5], %s435
        %p437 = pneg %p139
        %p438 = pneg %p136
        %s439 = sand.u32 %s28, 1
        %s440 = scalar_lea.sflag [#allocation6], %s439
        %s441 = sand.u32 %s152, 1
        %s442 = smul.addr %s441, 128
        %s443 = scalar_lea.vmem [#allocation7], %s442
        %p444 = pneg %p165
        %p445 = pneg %p162
        %p446 = scmp.lt.s32.totalorder %s33, 1
        %s447 = scalar_select %p446, %s33, 1
        %s448 = smul.addr %s447, 2
        %s449 = scalar_lea.vmem %s5, %s448
        %p450 = pneg %p191
        %p451 = pneg %p188
        %s452 = sand.u32 %s204, 1
        %s453 = scalar_lea.sflag [#allocation9], %s452
        %s454 = sand.u32 %s204, 1
        %s455 = smul.addr %s454, 128
        %s456 = scalar_lea.vmem [#allocation8], %s455
        %p457 = pneg %p217
        %p458 = pneg %p214
        %p459 = pneg %p243
        %p460 = pneg %p240
        %s461 = smul.u32 2, %s32
        %p462 = scmp.lt.s32.totalorder %s461, 1
        %s463 = scalar_select %p462, %s461, 1
        %s464 = smul.addr %s463, 8
        %s465 = scalar_lea.vmem %s0, %s464
        %s466 = smul.u32 2, %s32
        %p467 = scmp.lt.s32.totalorder %s33, 1
        %s468 = scalar_select %p467, %s33, 1
        %s469 = smul.addr %s468, 8
        %s470 = scalar_lea.vmem %s1, %s469
        %p471 = scmp.lt.s32.totalorder %s33, 1
        %s472 = scalar_select %p471, %s33, 1
        %s473 = smul.addr %s472, 2
        %s474 = scalar_lea.vmem %s5, %s473
        %s475 = smul.u32 2, %s32
        %p477 = scmp.eq.s32.totalorder %s33, 0
        // Predicated region
        $region65: #{tpu_custom_call.1} parent=47 // pred_check
          %p478 = pneg %p477
        $region66: #{tpu_custom_call.1} parent=47 // pred_check_branch
          %480 = sbr.rel (%p478) target = $region68
        $region67: #{tpu_custom_call.1} parent=47 // pred_region
          %v481 = vld [vmem:[%s465] sm:$0xff]
          %v482 = vld [vmem:[%s465 + $0x8] sm:$0xff]
          %483 = vst [vmem:[#allocation10] sm:$0xff] %v481
          %484 = vst [vmem:[#allocation10 + $0x8] sm:$0xff] %v482
        $region68: #{tpu_custom_call.1} parent=47 // pred_fallthru
          _
        %v485 = vld [vmem:[#allocation10] sm:$0xff]
        %v486 = vld [vmem:[#allocation10 + $0x8] sm:$0xff]
        %v487 = vld [vmem:[%s470] sm:$0x1]
        %v488 = vld [vmem:[%s470 + $0x1] sm:$0x1]
        %v489 = vld [vmem:[%s470 + $0x2] sm:$0x1]
        %v490 = vld [vmem:[%s470 + $0x3] sm:$0x1]
        %v491 = vld [vmem:[%s470 + $0x4] sm:$0x1]
        %v492 = vld [vmem:[%s470 + $0x5] sm:$0x1]
        %v493 = vld [vmem:[%s474] sm:$0x3]
        %494 = vadd.xlane.f32.xlu0 %v485
        %v495 = vpop.xlane.xlu0 %494
        %496 = vadd.xlane.f32.xlu0 %v486
        %v497 = vpop.xlane.xlu0 %496
        %v498 = vrcp.pop 128.0
        %v499 = vmul.f32 %v495, %v498
        %v500 = vmul.f32 %v497, %v498
        %v501 = vsub.f32 %v485, %v499
        %v502 = vsub.f32 %v486, %v500
        %v503 = vmul.f32 %v501, %v501
        %v504 = vmul.f32 %v502, %v502
        %505 = vadd.xlane.f32.xlu0 %v503
        %v506 = vpop.xlane.xlu0 %505
        %507 = vadd.xlane.f32.xlu0 %v504
        %v508 = vpop.xlane.xlu0 %507
        %v509 = vmul.f32 %v506, %v498
        %v510 = vmul.f32 %v508, %v498
        %v511 = vadd.f32 %v509, 1e-05
        %v512 = vadd.f32 %v510, 1e-05
        %v513 = vrsqrt.pop %v511
        %v514 = vrsqrt.pop %v512
        %v515 = vmul.f32 %v501, %v513
        %v516 = vmul.f32 %v502, %v514
        %v517 = vlaneseq
        %v518 = vshrl.u32 %v517, 7
        %v519 = vsub.s32 0, %v518
        %v520 = vrot.slane %v487, %v519
        %v521 = vmul.f32 %v515, %v520
        %v522 = vmul.f32 %v516, %v520
        %v523 = vlaneseq
        %v524 = vshrl.u32 %v523, 7
        %v525 = vsub.s32 0, %v524
        %v526 = vrot.slane %v488, %v525
        %v527 = vadd.f32 %v521, %v526
        %v528 = vadd.f32 %v522, %v526
        %v529 = vpack.c.bf16 %v528, %v527
        %v530 = vld [vmem:[%s380] sm:$0xff]
        %v531 = vld [vmem:[%s380 + $0x8] sm:$0xf]
        %v532 = vld [vmem:[%s380 + $0xc] sm:$0xff]
        %v533 = vld [vmem:[%s380 + $0x14] sm:$0xf]
        %v534 = vld [vmem:[%s380 + $0x18] sm:$0xff]
        %v535 = vld [vmem:[%s380 + $0x20] sm:$0xf]
        %v536 = vld [vmem:[%s380 + $0x24] sm:$0xff]
        %v537 = vld [vmem:[%s380 + $0x2c] sm:$0xf]
        %v538 = vld [vmem:[%s380 + $0x30] sm:$0xff]
        %v539 = vld [vmem:[%s380 + $0x38] sm:$0xf]
        %v540 = vld [vmem:[%s380 + $0x3c] sm:$0xff]
        %v541 = vld [vmem:[%s380 + $0x44] sm:$0xf]
        %v542 = vld [vmem:[%s380 + $0x48] sm:$0xff]
        %v543 = vld [vmem:[%s380 + $0x50] sm:$0xf]
        %v544 = vld [vmem:[%s380 + $0x54] sm:$0xff]
        %v545 = vld [vmem:[%s380 + $0x5c] sm:$0xf]
        %v546 = vld [vmem:[%s380 + $0x60] sm:$0xff]
        %v547 = vld [vmem:[%s380 + $0x68] sm:$0xf]
        %v548 = vld [vmem:[%s380 + $0x6c] sm:$0xff]
        %v549 = vld [vmem:[%s380 + $0x74] sm:$0xf]
        %v550 = vld [vmem:[%s380 + $0x78] sm:$0xff]
        %v551 = vld [vmem:[%s380 + $0x80] sm:$0xf]
        %v552 = vld [vmem:[%s380 + $0x84] sm:$0xff]
        %v553 = vld [vmem:[%s380 + $0x8c] sm:$0xf]
        %v554 = vld [vmem:[%s380 + $0x90] sm:$0xff]
        %v555 = vld [vmem:[%s380 + $0x98] sm:$0xf]
        %v556 = vld [vmem:[%s380 + $0x9c] sm:$0xff]
        %v557 = vld [vmem:[%s380 + $0xa4] sm:$0xf]
        %v558 = vld [vmem:[%s380 + $0xa8] sm:$0xff]
        %v559 = vld [vmem:[%s380 + $0xb0] sm:$0xf]
        %v560 = vld [vmem:[%s380 + $0xb4] sm:$0xff]
        %v561 = vld [vmem:[%s380 + $0xbc] sm:$0xf]
        %v594 = vunpack.c.l.b16 %v530
        %v595 = vunpack.c.h.b16 %v530
        %v596 = vunpack.c.l.b16 %v531
        %v597 = vunpack.c.l.b16 %v532
        %v598 = vunpack.c.h.b16 %v532
        %v599 = vunpack.c.l.b16 %v533
        %v600 = vunpack.c.l.b16 %v534
        %v601 = vunpack.c.h.b16 %v534
        %v602 = vunpack.c.l.b16 %v535
        %v603 = vunpack.c.l.b16 %v536
        %v604 = vunpack.c.h.b16 %v536
        %v605 = vunpack.c.l.b16 %v537
        %v606 = vunpack.c.l.b16 %v538
        %v607 = vunpack.c.h.b16 %v538
        %v608 = vunpack.c.l.b16 %v539
        %v609 = vunpack.c.l.b16 %v540
        %v610 = vunpack.c.h.b16 %v540
        %v611 = vunpack.c.l.b16 %v541
        %v612 = vunpack.c.l.b16 %v542
        %v613 = vunpack.c.h.b16 %v542
        %v614 = vunpack.c.l.b16 %v543
        %v615 = vunpack.c.l.b16 %v544
        %v616 = vunpack.c.h.b16 %v544
        %v617 = vunpack.c.l.b16 %v545
        %v618 = vunpack.c.l.b16 %v546
        %v619 = vunpack.c.h.b16 %v546
        %v620 = vunpack.c.l.b16 %v547
        %v621 = vunpack.c.l.b16 %v548
        %v622 = vunpack.c.h.b16 %v548
        %v623 = vunpack.c.l.b16 %v549
        %v624 = vunpack.c.l.b16 %v550
        %v625 = vunpack.c.h.b16 %v550
        %v626 = vunpack.c.l.b16 %v551
        %v627 = vunpack.c.l.b16 %v552
        %v628 = vunpack.c.h.b16 %v552
        %v629 = vunpack.c.l.b16 %v553
        %v630 = vunpack.c.l.b16 %v554
        %v631 = vunpack.c.h.b16 %v554
        %v632 = vunpack.c.l.b16 %v555
        %v633 = vunpack.c.l.b16 %v556
        %v634 = vunpack.c.h.b16 %v556
        %v635 = vunpack.c.l.b16 %v557
        %v636 = vunpack.c.l.b16 %v558
        %v637 = vunpack.c.h.b16 %v558
        %v638 = vunpack.c.l.b16 %v559
        %v639 = vunpack.c.l.b16 %v560
        %v640 = vunpack.c.h.b16 %v560
        %v641 = vunpack.c.l.b16 %v561
        %v642 = vpack.c.b16 %v597, %v594
        %v643 = vpack.c.b16 %v598, %v595
        %v644 = vpack.c.b16 %v599, %v596
        %v645 = vpack.c.b16 %v603, %v600
        %v646 = vpack.c.b16 %v604, %v601
        %v647 = vpack.c.b16 %v605, %v602
        %v648 = vpack.c.b16 %v609, %v606
        %v649 = vpack.c.b16 %v610, %v607
        %v650 = vpack.c.b16 %v611, %v608
        %v651 = vpack.c.b16 %v615, %v612
        %v652 = vpack.c.b16 %v616, %v613
        %v653 = vpack.c.b16 %v617, %v614
        %v654 = vpack.c.b16 %v621, %v618
        %v655 = vpack.c.b16 %v622, %v619
        %v656 = vpack.c.b16 %v623, %v620
        %v657 = vpack.c.b16 %v627, %v624
        %v658 = vpack.c.b16 %v628, %v625
        %v659 = vpack.c.b16 %v629, %v626
        %v660 = vpack.c.b16 %v633, %v630
        %v661 = vpack.c.b16 %v634, %v631
        %v662 = vpack.c.b16 %v635, %v632
        %v663 = vpack.c.b16 %v639, %v636
        %v664 = vpack.c.b16 %v640, %v637
        %v665 = vpack.c.b16 %v641, %v638
        %690 = vmatprep.subr.bf16.mxu0 %v664
        %691 = vmatpush1.bf16.msra.mxu0 %v663
        %692 = vmatprep.subr.bf16.mxu0 %v661
        %693 = vmatpush1.bf16.msra.mxu0 %v660
        %694 = vmatprep.subr.bf16.mxu0 %v658
        %695 = vmatpush1.bf16.msra.mxu0 %v657
        %696 = vmatprep.subr.bf16.mxu0 %v655
        %697 = vmatpush1.bf16.msra.mxu0 %v654
        %698 = vmatprep.subr.bf16.mxu0 %v652
        %699 = vmatpush1.bf16.msra.mxu0 %v651
        %700 = vmatprep.subr.bf16.mxu0 %v649
        %701 = vmatpush1.bf16.msra.mxu0 %v648
        %702 = vmatprep.subr.bf16.mxu0 %v646
        %703 = vmatpush1.bf16.msra.mxu0 %v645
        %704 = vmatprep.subr.bf16.mxu0 %v643
        %705 = vmatpush1.bf16.msra.mxu0 %v642
        %706 = vmatprep.subr.bf16.mxu0 0
        %707 = vmatpush2.bf16.msra.mxu0 0
        %708 = vmatprep.subr.bf16.mxu0 0
        %709 = vmatpush2.bf16.msra.mxu0 0
        %710 = vmatprep.subr.bf16.mxu0 0
        %711 = vmatpush2.bf16.msra.mxu0 0
        %712 = vmatprep.subr.bf16.mxu0 0
        %713 = vmatpush2.bf16.msra.mxu0 0
        %714 = vmatprep.subr.bf16.mxu0 0
        %715 = vmatpush2.bf16.msra.mxu0 0
        %716 = vmatprep.subr.bf16.mxu0 0
        %717 = vmatpush2.bf16.msra.mxu0 0
        %718 = vmatprep.subr.bf16.mxu0 0
        %719 = vmatpush2.bf16.msra.mxu0 0
        %720 = vmatprep.subr.bf16.mxu0 0
        %721 = vmatpush2.bf16.msra.mxu0 0
        %722 = vmatprep.mubr.bf16.mxu0 0
        %723 = vmatmul.mubr.bf16.gmra.mxu0 %v529
        %v724 = vpop.f32.mrf.mxu0
        %v725 = vadd.f32 0.0, %v724
        %v726 = vpop.f32.mrf.mxu0
        %v727 = vadd.f32 0.0, %v726
        %v728 = vpop.f32.mrf.mxu0
        %v729 = vadd.f32 0.0, %v728
        %v730 = vpop.f32.mrf.mxu0
        %v731 = vadd.f32 0.0, %v730
        %732 = vdwg.mxu0
        %733 = vmatprep.subr.bf16.mxu0 0
        %734 = vmatpush1.bf16.msra.mxu0 %v665
        %735 = vmatprep.subr.bf16.mxu0 0
        %736 = vmatpush1.bf16.msra.mxu0 %v662
        %737 = vmatprep.subr.bf16.mxu0 0
        %738 = vmatpush1.bf16.msra.mxu0 %v659
        %739 = vmatprep.subr.bf16.mxu0 0
        %740 = vmatpush1.bf16.msra.mxu0 %v656
        %741 = vmatprep.subr.bf16.mxu0 0
        %742 = vmatpush1.bf16.msra.mxu0 %v653
        %743 = vmatprep.subr.bf16.mxu0 0
        %744 = vmatpush1.bf16.msra.mxu0 %v650
        %745 = vmatprep.subr.bf16.mxu0 0
        %746 = vmatpush1.bf16.msra.mxu0 %v647
        %747 = vmatprep.subr.bf16.mxu0 0
        %748 = vmatpush1.bf16.msra.mxu0 %v644
        %749 = vmatprep.subr.bf16.mxu0 0
        %750 = vmatpush2.bf16.msra.mxu0 0
        %751 = vmatprep.subr.bf16.mxu0 0
        %752 = vmatpush2.bf16.msra.mxu0 0
        %753 = vmatprep.subr.bf16.mxu0 0
        %754 = vmatpush2.bf16.msra.mxu0 0
        %755 = vmatprep.subr.bf16.mxu0 0
        %756 = vmatpush2.bf16.msra.mxu0 0
        %757 = vmatprep.subr.bf16.mxu0 0
        %758 = vmatpush2.bf16.msra.mxu0 0
        %759 = vmatprep.subr.bf16.mxu0 0
        %760 = vmatpush2.bf16.msra.mxu0 0
        %761 = vmatprep.subr.bf16.mxu0 0
        %762 = vmatpush2.bf16.msra.mxu0 0
        %763 = vmatprep.subr.bf16.mxu0 0
        %764 = vmatpush2.bf16.msra.mxu0 0
        %765 = vmatprep.mubr.bf16.mxu0 0
        %766 = vmatmul.mubr.bf16.gmra.mxu0 %v529
        %v767 = vpop.f32.mrf.mxu0
        %v768 = vadd.f32 0.0, %v767
        %v769 = vpop.f32.mrf.mxu0
        %v770 = vpop.f32.mrf.mxu0
        %v771 = vadd.f32 0.0, %v770
        %v772 = vpop.f32.mrf.mxu0
        %773 = vdwg.mxu0
        %v774 = vmul.f32 %v725, 0.17677669
        %v775 = vmul.f32 %v729, 0.17677669
        %v776 = vpack.c.bf16 %v774, %v774
        %v777 = vpack.c.bf16 %v775, %v775
        %v778 = vpack.c.bf16 %v727, %v727
        %v779 = vpack.c.bf16 %v731, %v731
        %v780 = vpack.c.bf16 %v768, %v768
        %v781 = vpack.c.bf16 %v771, %v771
        %vm782 = vcmask 261120
        %v784 = vsel %vm782, %v776, 0
        %v787 = vsel %vm782, %v778, 0
        %789 = vmatprep.subr.bf16.mxu0 0
        %790 = vmatpush1.bf16.xpose.msra.mxu0 0
        %791 = vmatprep.subr.bf16.mxu0 0
        %792 = vmatpush1.bf16.xpose.msra.mxu0 0
        %793 = vmatprep.subr.bf16.mxu0 0
        %794 = vmatpush1.bf16.xpose.msra.mxu0 0
        %795 = vmatprep.subr.bf16.mxu0 0
        %796 = vmatpush1.bf16.xpose.msra.mxu0 0
        %797 = vmatprep.subr.bf16.mxu0 0
        %798 = vmatpush1.bf16.xpose.msra.mxu0 0
        %799 = vmatprep.subr.bf16.mxu0 0
        %800 = vmatpush1.bf16.xpose.msra.mxu0 0
        %801 = vmatprep.subr.bf16.mxu0 0
        %802 = vmatpush1.bf16.xpose.msra.mxu0 0
        %803 = vmatprep.subr.bf16.mxu0 0
        %804 = vmatpush1.bf16.xpose.msra.mxu0 %v787
        %805 = vmatprep.subr.bf16.mxu0 0
        %806 = vmatpush2.bf16.xpose.msra.mxu0 0
        %807 = vmatprep.subr.bf16.mxu0 0
        %808 = vmatpush2.bf16.xpose.msra.mxu0 0
        %809 = vmatprep.subr.bf16.mxu0 0
        %810 = vmatpush2.bf16.xpose.msra.mxu0 0
        %811 = vmatprep.subr.bf16.mxu0 0
        %812 = vmatpush2.bf16.xpose.msra.mxu0 0
        %813 = vmatprep.subr.bf16.mxu0 0
        %814 = vmatpush2.bf16.xpose.msra.mxu0 0
        %815 = vmatprep.subr.bf16.mxu0 0
        %816 = vmatpush2.bf16.xpose.msra.mxu0 0
        %817 = vmatprep.subr.bf16.mxu0 0
        %818 = vmatpush2.bf16.xpose.msra.mxu0 0
        %819 = vmatprep.subr.bf16.mxu0 0
        %820 = vmatpush2.bf16.xpose.msra.mxu0 0
        %821 = vmatprep.mubr.bf16.mxu0 0
        %822 = vmatmul.mubr.bf16.gmra.mxu0 %v784
        %v823 = vpop.f32.mrf.mxu0
        %v824 = vadd.f32 0.0, %v823
        %v825 = vpop.f32.mrf.mxu0
        %v826 = vpop.f32.mrf.mxu0
        %v827 = vpop.f32.mrf.mxu0
        %828 = vdwg.mxu0
        %v830 = vsel %vm782, %v777, 0
        %v833 = vsel %vm782, %v779, 0
        %835 = vmatprep.subr.bf16.mxu0 0
        %836 = vmatpush1.bf16.xpose.msra.mxu0 0
        %837 = vmatprep.subr.bf16.mxu0 0
        %838 = vmatpush1.bf16.xpose.msra.mxu0 0
        %839 = vmatprep.subr.bf16.mxu0 0
        %840 = vmatpush1.bf16.xpose.msra.mxu0 0
        %841 = vmatprep.subr.bf16.mxu0 0
        %842 = vmatpush1.bf16.xpose.msra.mxu0 0
        %843 = vmatprep.subr.bf16.mxu0 0
        %844 = vmatpush1.bf16.xpose.msra.mxu0 0
        %845 = vmatprep.subr.bf16.mxu0 0
        %846 = vmatpush1.bf16.xpose.msra.mxu0 0
        %847 = vmatprep.subr.bf16.mxu0 0
        %848 = vmatpush1.bf16.xpose.msra.mxu0 0
        %849 = vmatprep.subr.bf16.mxu0 0
        %850 = vmatpush1.bf16.xpose.msra.mxu0 %v833
        %851 = vmatprep.subr.bf16.mxu0 0
        %852 = vmatpush2.bf16.xpose.msra.mxu0 0
        %853 = vmatprep.subr.bf16.mxu0 0
        %854 = vmatpush2.bf16.xpose.msra.mxu0 0
        %855 = vmatprep.subr.bf16.mxu0 0
        %856 = vmatpush2.bf16.xpose.msra.mxu0 0
        %857 = vmatprep.subr.bf16.mxu0 0
        %858 = vmatpush2.bf16.xpose.msra.mxu0 0
        %859 = vmatprep.subr.bf16.mxu0 0
        %860 = vmatpush2.bf16.xpose.msra.mxu0 0
        %861 = vmatprep.subr.bf16.mxu0 0
        %862 = vmatpush2.bf16.xpose.msra.mxu0 0
        %863 = vmatprep.subr.bf16.mxu0 0
        %864 = vmatpush2.bf16.xpose.msra.mxu0 0
        %865 = vmatprep.subr.bf16.mxu0 0
        %866 = vmatpush2.bf16.xpose.msra.mxu0 0
        %867 = vmatprep.mubr.bf16.mxu0 0
        %868 = vmatmul.mubr.bf16.gmra.mxu0 %v830
        %v869 = vpop.f32.mrf.mxu0
        %v870 = vadd.f32 0.0, %v869
        %v871 = vpop.f32.mrf.mxu0
        %v872 = vpop.f32.mrf.mxu0
        %v873 = vpop.f32.mrf.mxu0
        %874 = vdwg.mxu0
        %vm875 = vcmask 64512
        %v876 = vsel %vm875, %v824, -inf
        %877 = vmax.xlane.f32.xlu0 %v876
        %v878 = vpop.xlane.xlu0 %877
        %v879 = vsel %vm875, %v870, -inf
        %880 = vmax.xlane.f32.xlu0 %v879
        %v881 = vpop.xlane.xlu0 %880
        %v882 = vsub.f32 %v824, %v878
        %v883 = vsub.f32 %v870, %v881
        %v884 = vmul.f32 %v882, 1.442695
        %v885 = vpow.pop %v884
        %v886 = vmul.f32 %v883, 1.442695
        %v887 = vpow.pop %v886
        %v888 = vsel %vm875, %v885, 0.0
        %889 = vadd.xlane.f32.xlu0 %v888
        %v890 = vpop.xlane.xlu0 %889
        %v891 = vsel %vm875, %v887, 0.0
        %892 = vadd.xlane.f32.xlu0 %v891
        %v893 = vpop.xlane.xlu0 %892
        %v894 = vrcp.pop %v890
        %v895 = vrcp.pop %v893
        %v896 = vmul.f32 %v885, %v894
        %v897 = vmul.f32 %v887, %v895
        %v898 = vpack.c.bf16 %v896, %v896
        %v899 = vpack.c.bf16 %v897, %v897
        %v901 = vsel %vm875, %v898, 0
        %vm903 = vcmask 1043456
        %v905 = vsel %vm903, %v780, 0
        %907 = vmatprep.subr.bf16.mxu0 0
        %908 = vmatpush1.bf16.msra.mxu0 0
        %909 = vmatprep.subr.bf16.mxu0 0
        %910 = vmatpush1.bf16.msra.mxu0 0
        %911 = vmatprep.subr.bf16.mxu0 0
        %912 = vmatpush1.bf16.msra.mxu0 0
        %913 = vmatprep.subr.bf16.mxu0 0
        %914 = vmatpush1.bf16.msra.mxu0 0
        %915 = vmatprep.subr.bf16.mxu0 0
        %916 = vmatpush1.bf16.msra.mxu0 0
        %917 = vmatprep.subr.bf16.mxu0 0
        %918 = vmatpush1.bf16.msra.mxu0 0
        %919 = vmatprep.subr.bf16.mxu0 0
        %920 = vmatpush1.bf16.msra.mxu0 0
        %921 = vmatprep.subr.bf16.mxu0 0
        %922 = vmatpush1.bf16.msra.mxu0 %v905
        %923 = vmatprep.subr.bf16.mxu0 0
        %924 = vmatpush2.bf16.msra.mxu0 0
        %925 = vmatprep.subr.bf16.mxu0 0
        %926 = vmatpush2.bf16.msra.mxu0 0
        %927 = vmatprep.subr.bf16.mxu0 0
        %928 = vmatpush2.bf16.msra.mxu0 0
        %929 = vmatprep.subr.bf16.mxu0 0
        %930 = vmatpush2.bf16.msra.mxu0 0
        %931 = vmatprep.subr.bf16.mxu0 0
        %932 = vmatpush2.bf16.msra.mxu0 0
        %933 = vmatprep.subr.bf16.mxu0 0
        %934 = vmatpush2.bf16.msra.mxu0 0
        %935 = vmatprep.subr.bf16.mxu0 0
        %936 = vmatpush2.bf16.msra.mxu0 0
        %937 = vmatprep.subr.bf16.mxu0 0
        %938 = vmatpush2.bf16.msra.mxu0 0
        %939 = vmatprep.mubr.bf16.mxu0 0
        %940 = vmatmul.mubr.bf16.gmra.mxu0 %v901
        %v941 = vpop.f32.mrf.mxu0
        %v942 = vadd.f32 0.0, %v941
        %v943 = vpop.f32.mrf.mxu0
        %v944 = vpop.f32.mrf.mxu0
        %v945 = vpop.f32.mrf.mxu0
        %946 = vdwg.mxu0
        %v948 = vsel %vm875, %v899, 0
        %v951 = vsel %vm903, %v781, 0
        %953 = vmatprep.subr.bf16.mxu0 0
        %954 = vmatpush1.bf16.msra.mxu0 0
        %955 = vmatprep.subr.bf16.mxu0 0
        %956 = vmatpush1.bf16.msra.mxu0 0
        %957 = vmatprep.subr.bf16.mxu0 0
        %958 = vmatpush1.bf16.msra.mxu0 0
        %959 = vmatprep.subr.bf16.mxu0 0
        %960 = vmatpush1.bf16.msra.mxu0 0
        %961 = vmatprep.subr.bf16.mxu0 0
        %962 = vmatpush1.bf16.msra.mxu0 0
        %963 = vmatprep.subr.bf16.mxu0 0
        %964 = vmatpush1.bf16.msra.mxu0 0
        %965 = vmatprep.subr.bf16.mxu0 0
        %966 = vmatpush1.bf16.msra.mxu0 0
        %967 = vmatprep.subr.bf16.mxu0 0
        %968 = vmatpush1.bf16.msra.mxu0 %v951
        %969 = vmatprep.subr.bf16.mxu0 0
        %970 = vmatpush2.bf16.msra.mxu0 0
        %971 = vmatprep.subr.bf16.mxu0 0
        %972 = vmatpush2.bf16.msra.mxu0 0
        %973 = vmatprep.subr.bf16.mxu0 0
        %974 = vmatpush2.bf16.msra.mxu0 0
        %975 = vmatprep.subr.bf16.mxu0 0
        %976 = vmatpush2.bf16.msra.mxu0 0
        %977 = vmatprep.subr.bf16.mxu0 0
        %978 = vmatpush2.bf16.msra.mxu0 0
        %979 = vmatprep.subr.bf16.mxu0 0
        %980 = vmatpush2.bf16.msra.mxu0 0
        %981 = vmatprep.subr.bf16.mxu0 0
        %982 = vmatpush2.bf16.msra.mxu0 0
        %983 = vmatprep.subr.bf16.mxu0 0
        %984 = vmatpush2.bf16.msra.mxu0 0
        %985 = vmatprep.mubr.bf16.mxu0 0
        %986 = vmatmul.mubr.bf16.gmra.mxu0 %v948
        %v987 = vpop.f32.mrf.mxu0
        %v988 = vadd.f32 0.0, %v987
        %v989 = vpop.f32.mrf.mxu0
        %v990 = vpop.f32.mrf.mxu0
        %v991 = vpop.f32.mrf.mxu0
        %992 = vdwg.mxu0
        %994 = vrot.lane.b32.xlu0 %v776, 96
        %v995 = vpop.permute.xlu0 %994
        %997 = vrot.lane.b32.xlu0 %v778, 96
        %v998 = vpop.permute.xlu0 %997
        %v1000 = vsel %vm782, %v995, 0
        %v1003 = vsel %vm782, %v998, 0
        %1005 = vmatprep.subr.bf16.mxu0 0
        %1006 = vmatpush1.bf16.xpose.msra.mxu0 0
        %1007 = vmatprep.subr.bf16.mxu0 0
        %1008 = vmatpush1.bf16.xpose.msra.mxu0 0
        %1009 = vmatprep.subr.bf16.mxu0 0
        %1010 = vmatpush1.bf16.xpose.msra.mxu0 0
        %1011 = vmatprep.subr.bf16.mxu0 0
        %1012 = vmatpush1.bf16.xpose.msra.mxu0 0
        %1013 = vmatprep.subr.bf16.mxu0 0
        %1014 = vmatpush1.bf16.xpose.msra.mxu0 0
        %1015 = vmatprep.subr.bf16.mxu0 0
        %1016 = vmatpush1.bf16.xpose.msra.mxu0 0
        %1017 = vmatprep.subr.bf16.mxu0 0
        %1018 = vmatpush1.bf16.xpose.msra.mxu0 0
        %1019 = vmatprep.subr.bf16.mxu0 0
        %1020 = vmatpush1.bf16.xpose.msra.mxu0 %v1003
        %1021 = vmatprep.subr.bf16.mxu0 0
        %1022 = vmatpush2.bf16.xpose.msra.mxu0 0
        %1023 = vmatprep.subr.bf16.mxu0 0
        %1024 = vmatpush2.bf16.xpose.msra.mxu0 0
        %1025 = vmatprep.subr.bf16.mxu0 0
        %1026 = vmatpush2.bf16.xpose.msra.mxu0 0
        %1027 = vmatprep.subr.bf16.mxu0 0
        %1028 = vmatpush2.bf16.xpose.msra.mxu0 0
        %1029 = vmatprep.subr.bf16.mxu0 0
        %1030 = vmatpush2.bf16.xpose.msra.mxu0 0
        %1031 = vmatprep.subr.bf16.mxu0 0
        %1032 = vmatpush2.bf16.xpose.msra.mxu0 0
        %1033 = vmatprep.subr.bf16.mxu0 0
        %1034 = vmatpush2.bf16.xpose.msra.mxu0 0
        %1035 = vmatprep.subr.bf16.mxu0 0
        %1036 = vmatpush2.bf16.xpose.msra.mxu0 0
        %1037 = vmatprep.mubr.bf16.mxu0 0
        %1038 = vmatmul.mubr.bf16.gmra.mxu0 %v1000
        %v1039 = vpop.f32.mrf.mxu0
        %v1040 = vadd.f32 0.0, %v1039
        %v1041 = vpop.f32.mrf.mxu0
        %v1042 = vpop.f32.mrf.mxu0
        %v1043 = vpop.f32.mrf.mxu0
        %1044 = vdwg.mxu0
        %1046 = vrot.lane.b32.xlu0 %v777, 96
        %v1047 = vpop.permute.xlu0 %1046
        %1049 = vrot.lane.b32.xlu0 %v779, 96
        %v1050 = vpop.permute.xlu0 %1049
        %v1052 = vsel %vm782, %v1047, 0
        %v1055 = vsel %vm782, %v1050, 0
        %1057 = vmatprep.subr.bf16.mxu0 0
        %1058 = vmatpush1.bf16.xpose.msra.mxu0 0
        %1059 = vmatprep.subr.bf16.mxu0 0
        %1060 = vmatpush1.bf16.xpose.msra.mxu0 0
        %1061 = vmatprep.subr.bf16.mxu0 0
        %1062 = vmatpush1.bf16.xpose.msra.mxu0 0
        %1063 = vmatprep.subr.bf16.mxu0 0
        %1064 = vmatpush1.bf16.xpose.msra.mxu0 0
        %1065 = vmatprep.subr.bf16.mxu0 0
        %1066 = vmatpush1.bf16.xpose.msra.mxu0 0
        %1067 = vmatprep.subr.bf16.mxu0 0
        %1068 = vmatpush1.bf16.xpose.msra.mxu0 0
        %1069 = vmatprep.subr.bf16.mxu0 0
        %1070 = vmatpush1.bf16.xpose.msra.mxu0 0
        %1071 = vmatprep.subr.bf16.mxu0 0
        %1072 = vmatpush1.bf16.xpose.msra.mxu0 %v1055
        %1073 = vmatprep.subr.bf16.mxu0 0
        %1074 = vmatpush2.bf16.xpose.msra.mxu0 0
        %1075 = vmatprep.subr.bf16.mxu0 0
        %1076 = vmatpush2.bf16.xpose.msra.mxu0 0
        %1077 = vmatprep.subr.bf16.mxu0 0
        %1078 = vmatpush2.bf16.xpose.msra.mxu0 0
        %1079 = vmatprep.subr.bf16.mxu0 0
        %1080 = vmatpush2.bf16.xpose.msra.mxu0 0
        %1081 = vmatprep.subr.bf16.mxu0 0
        %1082 = vmatpush2.bf16.xpose.msra.mxu0 0
        %1083 = vmatprep.subr.bf16.mxu0 0
        %1084 = vmatpush2.bf16.xpose.msra.mxu0 0
        %1085 = vmatprep.subr.bf16.mxu0 0
        %1086 = vmatpush2.bf16.xpose.msra.mxu0 0
        %1087 = vmatprep.subr.bf16.mxu0 0
        %1088 = vmatpush2.bf16.xpose.msra.mxu0 0
        %1089 = vmatprep.mubr.bf16.mxu0 0
        %1090 = vmatmul.mubr.bf16.gmra.mxu0 %v1052
        %v1091 = vpop.f32.mrf.mxu0
        %v1092 = vadd.f32 0.0, %v1091
        %v1093 = vpop.f32.mrf.mxu0
        %v1094 = vpop.f32.mrf.mxu0
        %v1095 = vpop.f32.mrf.mxu0
        %1096 = vdwg.mxu0
        %v1097 = vsel %vm875, %v1040, -inf
        %1098 = vmax.xlane.f32.xlu0 %v1097
        %v1099 = vpop.xlane.xlu0 %1098
        %v1100 = vsel %vm875, %v1092, -inf
        %1101 = vmax.xlane.f32.xlu0 %v1100
        %v1102 = vpop.xlane.xlu0 %1101
        %v1103 = vsub.f32 %v1040, %v1099
        %v1104 = vsub.f32 %v1092, %v1102
        %v1105 = vmul.f32 %v1103, 1.442695
        %v1106 = vpow.pop %v1105
        %v1107 = vmul.f32 %v1104, 1.442695
        %v1108 = vpow.pop %v1107
        %v1109 = vsel %vm875, %v1106, 0.0
        %1110 = vadd.xlane.f32.xlu0 %v1109
        %v1111 = vpop.xlane.xlu0 %1110
        %v1112 = vsel %vm875, %v1108, 0.0
        %1113 = vadd.xlane.f32.xlu0 %v1112
        %v1114 = vpop.xlane.xlu0 %1113
        %v1115 = vrcp.pop %v1111
        %v1116 = vrcp.pop %v1114
        %v1117 = vmul.f32 %v1106, %v1115
        %v1118 = vmul.f32 %v1108, %v1116
        %v1119 = vpack.c.bf16 %v1117, %v1117
        %v1120 = vpack.c.bf16 %v1118, %v1118
        %1122 = vrot.lane.b32.xlu0 %v780, 96
        %v1123 = vpop.permute.xlu0 %1122
        %v1125 = vsel %vm875, %v1119, 0
        %v1128 = vsel %vm903, %v1123, 0
        %1130 = vmatprep.subr.bf16.mxu0 0
        %1131 = vmatpush1.bf16.msra.mxu0 0
        %1132 = vmatprep.subr.bf16.mxu0 0
        %1133 = vmatpush1.bf16.msra.mxu0 0
        %1134 = vmatprep.subr.bf16.mxu0 0
        %1135 = vmatpush1.bf16.msra.mxu0 0
        %1136 = vmatprep.subr.bf16.mxu0 0
        %1137 = vmatpush1.bf16.msra.mxu0 0
        %1138 = vmatprep.subr.bf16.mxu0 0
        %1139 = vmatpush1.bf16.msra.mxu0 0
        %1140 = vmatprep.subr.bf16.mxu0 0
        %1141 = vmatpush1.bf16.msra.mxu0 0
        %1142 = vmatprep.subr.bf16.mxu0 0
        %1143 = vmatpush1.bf16.msra.mxu0 0
        %1144 = vmatprep.subr.bf16.mxu0 0
        %1145 = vmatpush1.bf16.msra.mxu0 %v1128
        %1146 = vmatprep.subr.bf16.mxu0 0
        %1147 = vmatpush2.bf16.msra.mxu0 0
        %1148 = vmatprep.subr.bf16.mxu0 0
        %1149 = vmatpush2.bf16.msra.mxu0 0
        %1150 = vmatprep.subr.bf16.mxu0 0
        %1151 = vmatpush2.bf16.msra.mxu0 0
        %1152 = vmatprep.subr.bf16.mxu0 0
        %1153 = vmatpush2.bf16.msra.mxu0 0
        %1154 = vmatprep.subr.bf16.mxu0 0
        %1155 = vmatpush2.bf16.msra.mxu0 0
        %1156 = vmatprep.subr.bf16.mxu0 0
        %1157 = vmatpush2.bf16.msra.mxu0 0
        %1158 = vmatprep.subr.bf16.mxu0 0
        %1159 = vmatpush2.bf16.msra.mxu0 0
        %1160 = vmatprep.subr.bf16.mxu0 0
        %1161 = vmatpush2.bf16.msra.mxu0 0
        %1162 = vmatprep.mubr.bf16.mxu0 0
        %1163 = vmatmul.mubr.bf16.gmra.mxu0 %v1125
        %v1164 = vpop.f32.mrf.mxu0
        %v1165 = vadd.f32 0.0, %v1164
        %v1166 = vpop.f32.mrf.mxu0
        %v1167 = vpop.f32.mrf.mxu0
        %v1168 = vpop.f32.mrf.mxu0
        %1169 = vdwg.mxu0
        %1171 = vrot.lane.b32.xlu0 %v781, 96
        %v1172 = vpop.permute.xlu0 %1171
        %v1174 = vsel %vm875, %v1120, 0
        %v1177 = vsel %vm903, %v1172, 0
        %1179 = vmatprep.subr.bf16.mxu0 0
        %1180 = vmatpush1.bf16.msra.mxu0 0
        %1181 = vmatprep.subr.bf16.mxu0 0
        %1182 = vmatpush1.bf16.msra.mxu0 0
        %1183 = vmatprep.subr.bf16.mxu0 0
        %1184 = vmatpush1.bf16.msra.mxu0 0
        %1185 = vmatprep.subr.bf16.mxu0 0
        %1186 = vmatpush1.bf16.msra.mxu0 0
        %1187 = vmatprep.subr.bf16.mxu0 0
        %1188 = vmatpush1.bf16.msra.mxu0 0
        %1189 = vmatprep.subr.bf16.mxu0 0
        %1190 = vmatpush1.bf16.msra.mxu0 0
        %1191 = vmatprep.subr.bf16.mxu0 0
        %1192 = vmatpush1.bf16.msra.mxu0 0
        %1193 = vmatprep.subr.bf16.mxu0 0
        %1194 = vmatpush1.bf16.msra.mxu0 %v1177
        %1195 = vmatprep.subr.bf16.mxu0 0
        %1196 = vmatpush2.bf16.msra.mxu0 0
        %1197 = vmatprep.subr.bf16.mxu0 0
        %1198 = vmatpush2.bf16.msra.mxu0 0
        %1199 = vmatprep.subr.bf16.mxu0 0
        %1200 = vmatpush2.bf16.msra.mxu0 0
        %1201 = vmatprep.subr.bf16.mxu0 0
        %1202 = vmatpush2.bf16.msra.mxu0 0
        %1203 = vmatprep.subr.bf16.mxu0 0
        %1204 = vmatpush2.bf16.msra.mxu0 0
        %1205 = vmatprep.subr.bf16.mxu0 0
        %1206 = vmatpush2.bf16.msra.mxu0 0
        %1207 = vmatprep.subr.bf16.mxu0 0
        %1208 = vmatpush2.bf16.msra.mxu0 0
        %1209 = vmatprep.subr.bf16.mxu0 0
        %1210 = vmatpush2.bf16.msra.mxu0 0
        %1211 = vmatprep.mubr.bf16.mxu0 0
        %1212 = vmatmul.mubr.bf16.gmra.mxu0 %v1174
        %v1213 = vpop.f32.mrf.mxu0
        %v1214 = vadd.f32 0.0, %v1213
        %v1215 = vpop.f32.mrf.mxu0
        %v1216 = vpop.f32.mrf.mxu0
        %v1217 = vpop.f32.mrf.mxu0
        %1218 = vdwg.mxu0
        %1219 = vrot.lane.b32.xlu0 %v776, 64
        %v1220 = vpop.permute.xlu0 %1219
        %1221 = vrot.lane.b32.xlu0 %v778, 64
        %v1222 = vpop.permute.xlu0 %1221
        %v1224 = vsel %vm782, %v1220, 0
        %v1227 = vsel %vm782, %v1222, 0
        %1229 = vmatprep.subr.bf16.mxu0 0
        %1230 = vmatpush1.bf16.xpose.msra.mxu0 0
        %1231 = vmatprep.subr.bf16.mxu0 0
        %1232 = vmatpush1.bf16.xpose.msra.mxu0 0
        %1233 = vmatprep.subr.bf16.mxu0 0
        %1234 = vmatpush1.bf16.xpose.msra.mxu0 0
        %1235 = vmatprep.subr.bf16.mxu0 0
        %1236 = vmatpush1.bf16.xpose.msra.mxu0 0
        %1237 = vmatprep.subr.bf16.mxu0 0
        %1238 = vmatpush1.bf16.xpose.msra.mxu0 0
        %1239 = vmatprep.subr.bf16.mxu0 0
        %1240 = vmatpush1.bf16.xpose.msra.mxu0 0
        %1241 = vmatprep.subr.bf16.mxu0 0
        %1242 = vmatpush1.bf16.xpose.msra.mxu0 0
        %1243 = vmatprep.subr.bf16.mxu0 0
        %1244 = vmatpush1.bf16.xpose.msra.mxu0 %v1227
        %1245 = vmatprep.subr.bf16.mxu0 0
        %1246 = vmatpush2.bf16.xpose.msra.mxu0 0
        %1247 = vmatprep.subr.bf16.mxu0 0
        %1248 = vmatpush2.bf16.xpose.msra.mxu0 0
        %1249 = vmatprep.subr.bf16.mxu0 0
        %1250 = vmatpush2.bf16.xpose.msra.mxu0 0
        %1251 = vmatprep.subr.bf16.mxu0 0
        %1252 = vmatpush2.bf16.xpose.msra.mxu0 0
        %1253 = vmatprep.subr.bf16.mxu0 0
        %1254 = vmatpush2.bf16.xpose.msra.mxu0 0
        %1255 = vmatprep.subr.bf16.mxu0 0
        %1256 = vmatpush2.bf16.xpose.msra.mxu0 0
        %1257 = vmatprep.subr.bf16.mxu0 0
        %1258 = vmatpush2.bf16.xpose.msra.mxu0 0
        %1259 = vmatprep.subr.bf16.mxu0 0
        %1260 = vmatpush2.bf16.xpose.msra.mxu0 0
        %1261 = vmatprep.mubr.bf16.mxu0 0
        %1262 = vmatmul.mubr.bf16.gmra.mxu0 %v1224
        %v1263 = vpop.f32.mrf.mxu0
        %v1264 = vadd.f32 0.0, %v1263
        %v1265 = vpop.f32.mrf.mxu0
        %v1266 = vpop.f32.mrf.mxu0
        %v1267 = vpop.f32.mrf.mxu0
        %1268 = vdwg.mxu0
        %1269 = vrot.lane.b32.xlu0 %v777, 64
        %v1270 = vpop.permute.xlu0 %1269
        %1271 = vrot.lane.b32.xlu0 %v779, 64
        %v1272 = vpop.permute.xlu0 %1271
        %v1274 = vsel %vm782, %v1270, 0
        %v1277 = vsel %vm782, %v1272, 0
        %1279 = vmatprep.subr.bf16.mxu0 0
        %1280 = vmatpush1.bf16.xpose.msra.mxu0 0
        %1281 = vmatprep.subr.bf16.mxu0 0
        %1282 = vmatpush1.bf16.xpose.msra.mxu0 0
        %1283 = vmatprep.subr.bf16.mxu0 0
        %1284 = vmatpush1.bf16.xpose.msra.mxu0 0
        %1285 = vmatprep.subr.bf16.mxu0 0
        %1286 = vmatpush1.bf16.xpose.msra.mxu0 0
        %1287 = vmatprep.subr.bf16.mxu0 0
        %1288 = vmatpush1.bf16.xpose.msra.mxu0 0
        %1289 = vmatprep.subr.bf16.mxu0 0
        %1290 = vmatpush1.bf16.xpose.msra.mxu0 0
        %1291 = vmatprep.subr.bf16.mxu0 0
        %1292 = vmatpush1.bf16.xpose.msra.mxu0 0
        %1293 = vmatprep.subr.bf16.mxu0 0
        %1294 = vmatpush1.bf16.xpose.msra.mxu0 %v1277
        %1295 = vmatprep.subr.bf16.mxu0 0
        %1296 = vmatpush2.bf16.xpose.msra.mxu0 0
        %1297 = vmatprep.subr.bf16.mxu0 0
        %1298 = vmatpush2.bf16.xpose.msra.mxu0 0
        %1299 = vmatprep.subr.bf16.mxu0 0
        %1300 = vmatpush2.bf16.xpose.msra.mxu0 0
        %1301 = vmatprep.subr.bf16.mxu0 0
        %1302 = vmatpush2.bf16.xpose.msra.mxu0 0
        %1303 = vmatprep.subr.bf16.mxu0 0
        %1304 = vmatpush2.bf16.xpose.msra.mxu0 0
        %1305 = vmatprep.subr.bf16.mxu0 0
        %1306 = vmatpush2.bf16.xpose.msra.mxu0 0
        %1307 = vmatprep.subr.bf16.mxu0 0
        %1308 = vmatpush2.bf16.xpose.msra.mxu0 0
        %1309 = vmatprep.subr.bf16.mxu0 0
        %1310 = vmatpush2.bf16.xpose.msra.mxu0 0
        %1311 = vmatprep.mubr.bf16.mxu0 0
        %1312 = vmatmul.mubr.bf16.gmra.mxu0 %v1274
        %v1313 = vpop.f32.mrf.mxu0
        %v1314 = vadd.f32 0.0, %v1313
        %v1315 = vpop.f32.mrf.mxu0
        %v1316 = vpop.f32.mrf.mxu0
        %v1317 = vpop.f32.mrf.mxu0
        %1318 = vdwg.mxu0
        %v1319 = vsel %vm875, %v1264, -inf
        %1320 = vmax.xlane.f32.xlu0 %v1319
        %v1321 = vpop.xlane.xlu0 %1320
        %v1322 = vsel %vm875, %v1314, -inf
        %1323 = vmax.xlane.f32.xlu0 %v1322
        %v1324 = vpop.xlane.xlu0 %1323
        %v1325 = vsub.f32 %v1264, %v1321
        %v1326 = vsub.f32 %v1314, %v1324
        %v1327 = vmul.f32 %v1325, 1.442695
        %v1328 = vpow.pop %v1327
        %v1329 = vmul.f32 %v1326, 1.442695
        %v1330 = vpow.pop %v1329
        %v1331 = vsel %vm875, %v1328, 0.0
        %1332 = vadd.xlane.f32.xlu0 %v1331
        %v1333 = vpop.xlane.xlu0 %1332
        %v1334 = vsel %vm875, %v1330, 0.0
        %1335 = vadd.xlane.f32.xlu0 %v1334
        %v1336 = vpop.xlane.xlu0 %1335
        %v1337 = vrcp.pop %v1333
        %v1338 = vrcp.pop %v1336
        %v1339 = vmul.f32 %v1328, %v1337
        %v1340 = vmul.f32 %v1330, %v1338
        %v1341 = vpack.c.bf16 %v1339, %v1339
        %v1342 = vpack.c.bf16 %v1340, %v1340
        %1343 = vrot.lane.b32.xlu0 %v780, 64
        %v1344 = vpop.permute.xlu0 %1343
        %v1346 = vsel %vm875, %v1341, 0
        %v1349 = vsel %vm903, %v1344, 0
        %1351 = vmatprep.subr.bf16.mxu0 0
        %1352 = vmatpush1.bf16.msra.mxu0 0
        %1353 = vmatprep.subr.bf16.mxu0 0
        %1354 = vmatpush1.bf16.msra.mxu0 0
        %1355 = vmatprep.subr.bf16.mxu0 0
        %1356 = vmatpush1.bf16.msra.mxu0 0
        %1357 = vmatprep.subr.bf16.mxu0 0
        %1358 = vmatpush1.bf16.msra.mxu0 0
        %1359 = vmatprep.subr.bf16.mxu0 0
        %1360 = vmatpush1.bf16.msra.mxu0 0
        %1361 = vmatprep.subr.bf16.mxu0 0
        %1362 = vmatpush1.bf16.msra.mxu0 0
        %1363 = vmatprep.subr.bf16.mxu0 0
        %1364 = vmatpush1.bf16.msra.mxu0 0
        %1365 = vmatprep.subr.bf16.mxu0 0
        %1366 = vmatpush1.bf16.msra.mxu0 %v1349
        %1367 = vmatprep.subr.bf16.mxu0 0
        %1368 = vmatpush2.bf16.msra.mxu0 0
        %1369 = vmatprep.subr.bf16.mxu0 0
        %1370 = vmatpush2.bf16.msra.mxu0 0
        %1371 = vmatprep.subr.bf16.mxu0 0
        %1372 = vmatpush2.bf16.msra.mxu0 0
        %1373 = vmatprep.subr.bf16.mxu0 0
        %1374 = vmatpush2.bf16.msra.mxu0 0
        %1375 = vmatprep.subr.bf16.mxu0 0
        %1376 = vmatpush2.bf16.msra.mxu0 0
        %1377 = vmatprep.subr.bf16.mxu0 0
        %1378 = vmatpush2.bf16.msra.mxu0 0
        %1379 = vmatprep.subr.bf16.mxu0 0
        %1380 = vmatpush2.bf16.msra.mxu0 0
        %1381 = vmatprep.subr.bf16.mxu0 0
        %1382 = vmatpush2.bf16.msra.mxu0 0
        %1383 = vmatprep.mubr.bf16.mxu0 0
        %1384 = vmatmul.mubr.bf16.gmra.mxu0 %v1346
        %v1385 = vpop.f32.mrf.mxu0
        %v1386 = vadd.f32 0.0, %v1385
        %v1387 = vpop.f32.mrf.mxu0
        %v1388 = vpop.f32.mrf.mxu0
        %v1389 = vpop.f32.mrf.mxu0
        %1390 = vdwg.mxu0
        %1391 = vrot.lane.b32.xlu0 %v781, 64
        %v1392 = vpop.permute.xlu0 %1391
        %v1394 = vsel %vm875, %v1342, 0
        %v1397 = vsel %vm903, %v1392, 0
        %1399 = vmatprep.subr.bf16.mxu0 0
        %1400 = vmatpush1.bf16.msra.mxu0 0
        %1401 = vmatprep.subr.bf16.mxu0 0
        %1402 = vmatpush1.bf16.msra.mxu0 0
        %1403 = vmatprep.subr.bf16.mxu0 0
        %1404 = vmatpush1.bf16.msra.mxu0 0
        %1405 = vmatprep.subr.bf16.mxu0 0
        %1406 = vmatpush1.bf16.msra.mxu0 0
        %1407 = vmatprep.subr.bf16.mxu0 0
        %1408 = vmatpush1.bf16.msra.mxu0 0
        %1409 = vmatprep.subr.bf16.mxu0 0
        %1410 = vmatpush1.bf16.msra.mxu0 0
        %1411 = vmatprep.subr.bf16.mxu0 0
        %1412 = vmatpush1.bf16.msra.mxu0 0
        %1413 = vmatprep.subr.bf16.mxu0 0
        %1414 = vmatpush1.bf16.msra.mxu0 %v1397
        %1415 = vmatprep.subr.bf16.mxu0 0
        %1416 = vmatpush2.bf16.msra.mxu0 0
        %1417 = vmatprep.subr.bf16.mxu0 0
        %1418 = vmatpush2.bf16.msra.mxu0 0
        %1419 = vmatprep.subr.bf16.mxu0 0
        %1420 = vmatpush2.bf16.msra.mxu0 0
        %1421 = vmatprep.subr.bf16.mxu0 0
        %1422 = vmatpush2.bf16.msra.mxu0 0
        %1423 = vmatprep.subr.bf16.mxu0 0
        %1424 = vmatpush2.bf16.msra.mxu0 0
        %1425 = vmatprep.subr.bf16.mxu0 0
        %1426 = vmatpush2.bf16.msra.mxu0 0
        %1427 = vmatprep.subr.bf16.mxu0 0
        %1428 = vmatpush2.bf16.msra.mxu0 0
        %1429 = vmatprep.subr.bf16.mxu0 0
        %1430 = vmatpush2.bf16.msra.mxu0 0
        %1431 = vmatprep.mubr.bf16.mxu0 0
        %1432 = vmatmul.mubr.bf16.gmra.mxu0 %v1394
        %v1433 = vpop.f32.mrf.mxu0
        %v1434 = vadd.f32 0.0, %v1433
        %v1435 = vpop.f32.mrf.mxu0
        %v1436 = vpop.f32.mrf.mxu0
        %v1437 = vpop.f32.mrf.mxu0
        %1438 = vdwg.mxu0
        %1439 = vrot.lane.b32.xlu0 %v776, 32
        %v1440 = vpop.permute.xlu0 %1439
        %1441 = vrot.lane.b32.xlu0 %v778, 32
        %v1442 = vpop.permute.xlu0 %1441
        %v1444 = vsel %vm782, %v1440, 0
        %v1447 = vsel %vm782, %v1442, 0
        %1449 = vmatprep.subr.bf16.mxu0 0
        %1450 = vmatpush1.bf16.xpose.msra.mxu0 0
        %1451 = vmatprep.subr.bf16.mxu0 0
        %1452 = vmatpush1.bf16.xpose.msra.mxu0 0
        %1453 = vmatprep.subr.bf16.mxu0 0
        %1454 = vmatpush1.bf16.xpose.msra.mxu0 0
        %1455 = vmatprep.subr.bf16.mxu0 0
        %1456 = vmatpush1.bf16.xpose.msra.mxu0 0
        %1457 = vmatprep.subr.bf16.mxu0 0
        %1458 = vmatpush1.bf16.xpose.msra.mxu0 0
        %1459 = vmatprep.subr.bf16.mxu0 0
        %1460 = vmatpush1.bf16.xpose.msra.mxu0 0
        %1461 = vmatprep.subr.bf16.mxu0 0
        %1462 = vmatpush1.bf16.xpose.msra.mxu0 0
        %1463 = vmatprep.subr.bf16.mxu0 0
        %1464 = vmatpush1.bf16.xpose.msra.mxu0 %v1447
        %1465 = vmatprep.subr.bf16.mxu0 0
        %1466 = vmatpush2.bf16.xpose.msra.mxu0 0
        %1467 = vmatprep.subr.bf16.mxu0 0
        %1468 = vmatpush2.bf16.xpose.msra.mxu0 0
        %1469 = vmatprep.subr.bf16.mxu0 0
        %1470 = vmatpush2.bf16.xpose.msra.mxu0 0
        %1471 = vmatprep.subr.bf16.mxu0 0
        %1472 = vmatpush2.bf16.xpose.msra.mxu0 0
        %1473 = vmatprep.subr.bf16.mxu0 0
        %1474 = vmatpush2.bf16.xpose.msra.mxu0 0
        %1475 = vmatprep.subr.bf16.mxu0 0
        %1476 = vmatpush2.bf16.xpose.msra.mxu0 0
        %1477 = vmatprep.subr.bf16.mxu0 0
        %1478 = vmatpush2.bf16.xpose.msra.mxu0 0
        %1479 = vmatprep.subr.bf16.mxu0 0
        %1480 = vmatpush2.bf16.xpose.msra.mxu0 0
        %1481 = vmatprep.mubr.bf16.mxu0 0
        %1482 = vmatmul.mubr.bf16.gmra.mxu0 %v1444
        %v1483 = vpop.f32.mrf.mxu0
        %v1484 = vadd.f32 0.0, %v1483
        %v1485 = vpop.f32.mrf.mxu0
        %v1486 = vpop.f32.mrf.mxu0
        %v1487 = vpop.f32.mrf.mxu0
        %1488 = vdwg.mxu0
        %1489 = vrot.lane.b32.xlu0 %v777, 32
        %v1490 = vpop.permute.xlu0 %1489
        %1491 = vrot.lane.b32.xlu0 %v779, 32
        %v1492 = vpop.permute.xlu0 %1491
        %v1494 = vsel %vm782, %v1490, 0
        %v1497 = vsel %vm782, %v1492, 0
        %1499 = vmatprep.subr.bf16.mxu0 0
        %1500 = vmatpush1.bf16.xpose.msra.mxu0 0
        %1501 = vmatprep.subr.bf16.mxu0 0
        %1502 = vmatpush1.bf16.xpose.msra.mxu0 0
        %1503 = vmatprep.subr.bf16.mxu0 0
        %1504 = vmatpush1.bf16.xpose.msra.mxu0 0
        %1505 = vmatprep.subr.bf16.mxu0 0
        %1506 = vmatpush1.bf16.xpose.msra.mxu0 0
        %1507 = vmatprep.subr.bf16.mxu0 0
        %1508 = vmatpush1.bf16.xpose.msra.mxu0 0
        %1509 = vmatprep.subr.bf16.mxu0 0
        %1510 = vmatpush1.bf16.xpose.msra.mxu0 0
        %1511 = vmatprep.subr.bf16.mxu0 0
        %1512 = vmatpush1.bf16.xpose.msra.mxu0 0
        %1513 = vmatprep.subr.bf16.mxu0 0
        %1514 = vmatpush1.bf16.xpose.msra.mxu0 %v1497
        %1515 = vmatprep.subr.bf16.mxu0 0
        %1516 = vmatpush2.bf16.xpose.msra.mxu0 0
        %1517 = vmatprep.subr.bf16.mxu0 0
        %1518 = vmatpush2.bf16.xpose.msra.mxu0 0
        %1519 = vmatprep.subr.bf16.mxu0 0
        %1520 = vmatpush2.bf16.xpose.msra.mxu0 0
        %1521 = vmatprep.subr.bf16.mxu0 0
        %1522 = vmatpush2.bf16.xpose.msra.mxu0 0
        %1523 = vmatprep.subr.bf16.mxu0 0
        %1524 = vmatpush2.bf16.xpose.msra.mxu0 0
        %1525 = vmatprep.subr.bf16.mxu0 0
        %1526 = vmatpush2.bf16.xpose.msra.mxu0 0
        %1527 = vmatprep.subr.bf16.mxu0 0
        %1528 = vmatpush2.bf16.xpose.msra.mxu0 0
        %1529 = vmatprep.subr.bf16.mxu0 0
        %1530 = vmatpush2.bf16.xpose.msra.mxu0 0
        %1531 = vmatprep.mubr.bf16.mxu0 0
        %1532 = vmatmul.mubr.bf16.gmra.mxu0 %v1494
        %v1533 = vpop.f32.mrf.mxu0
        %v1534 = vadd.f32 0.0, %v1533
        %v1535 = vpop.f32.mrf.mxu0
        %v1536 = vpop.f32.mrf.mxu0
        %v1537 = vpop.f32.mrf.mxu0
        %1538 = vdwg.mxu0
        %v1539 = vsel %vm875, %v1484, -inf
        %1540 = vmax.xlane.f32.xlu0 %v1539
        %v1541 = vpop.xlane.xlu0 %1540
        %v1542 = vsel %vm875, %v1534, -inf
        %1543 = vmax.xlane.f32.xlu0 %v1542
        %v1544 = vpop.xlane.xlu0 %1543
        %v1545 = vsub.f32 %v1484, %v1541
        %v1546 = vsub.f32 %v1534, %v1544
        %v1547 = vmul.f32 %v1545, 1.442695
        %v1548 = vpow.pop %v1547
        %v1549 = vmul.f32 %v1546, 1.442695
        %v1550 = vpow.pop %v1549
        %v1551 = vsel %vm875, %v1548, 0.0
        %1552 = vadd.xlane.f32.xlu0 %v1551
        %v1553 = vpop.xlane.xlu0 %1552
        %v1554 = vsel %vm875, %v1550, 0.0
        %1555 = vadd.xlane.f32.xlu0 %v1554
        %v1556 = vpop.xlane.xlu0 %1555
        %v1557 = vrcp.pop %v1553
        %v1558 = vrcp.pop %v1556
        %v1559 = vmul.f32 %v1548, %v1557
        %v1560 = vmul.f32 %v1550, %v1558
        %v1561 = vpack.c.bf16 %v1559, %v1559
        %v1562 = vpack.c.bf16 %v1560, %v1560
        %1563 = vrot.lane.b32.xlu0 %v780, 32
        %v1564 = vpop.permute.xlu0 %1563
        %v1566 = vsel %vm875, %v1561, 0
        %v1569 = vsel %vm903, %v1564, 0
        %1571 = vmatprep.subr.bf16.mxu0 0
        %1572 = vmatpush1.bf16.msra.mxu0 0
        %1573 = vmatprep.subr.bf16.mxu0 0
        %1574 = vmatpush1.bf16.msra.mxu0 0
        %1575 = vmatprep.subr.bf16.mxu0 0
        %1576 = vmatpush1.bf16.msra.mxu0 0
        %1577 = vmatprep.subr.bf16.mxu0 0
        %1578 = vmatpush1.bf16.msra.mxu0 0
        %1579 = vmatprep.subr.bf16.mxu0 0
        %1580 = vmatpush1.bf16.msra.mxu0 0
        %1581 = vmatprep.subr.bf16.mxu0 0
        %1582 = vmatpush1.bf16.msra.mxu0 0
        %1583 = vmatprep.subr.bf16.mxu0 0
        %1584 = vmatpush1.bf16.msra.mxu0 0
        %1585 = vmatprep.subr.bf16.mxu0 0
        %1586 = vmatpush1.bf16.msra.mxu0 %v1569
        %1587 = vmatprep.subr.bf16.mxu0 0
        %1588 = vmatpush2.bf16.msra.mxu0 0
        %1589 = vmatprep.subr.bf16.mxu0 0
        %1590 = vmatpush2.bf16.msra.mxu0 0
        %1591 = vmatprep.subr.bf16.mxu0 0
        %1592 = vmatpush2.bf16.msra.mxu0 0
        %1593 = vmatprep.subr.bf16.mxu0 0
        %1594 = vmatpush2.bf16.msra.mxu0 0
        %1595 = vmatprep.subr.bf16.mxu0 0
        %1596 = vmatpush2.bf16.msra.mxu0 0
        %1597 = vmatprep.subr.bf16.mxu0 0
        %1598 = vmatpush2.bf16.msra.mxu0 0
        %1599 = vmatprep.subr.bf16.mxu0 0
        %1600 = vmatpush2.bf16.msra.mxu0 0
        %1601 = vmatprep.subr.bf16.mxu0 0
        %1602 = vmatpush2.bf16.msra.mxu0 0
        %1603 = vmatprep.mubr.bf16.mxu0 0
        %1604 = vmatmul.mubr.bf16.gmra.mxu0 %v1566
        %v1605 = vpop.f32.mrf.mxu0
        %v1606 = vadd.f32 0.0, %v1605
        %v1607 = vpop.f32.mrf.mxu0
        %v1608 = vpop.f32.mrf.mxu0
        %v1609 = vpop.f32.mrf.mxu0
        %1610 = vdwg.mxu0
        %1611 = vrot.lane.b32.xlu0 %v781, 32
        %v1612 = vpop.permute.xlu0 %1611
        %v1614 = vsel %vm875, %v1562, 0
        %v1617 = vsel %vm903, %v1612, 0
        %1619 = vmatprep.subr.bf16.mxu0 0
        %1620 = vmatpush1.bf16.msra.mxu0 0
        %1621 = vmatprep.subr.bf16.mxu0 0
        %1622 = vmatpush1.bf16.msra.mxu0 0
        %1623 = vmatprep.subr.bf16.mxu0 0
        %1624 = vmatpush1.bf16.msra.mxu0 0
        %1625 = vmatprep.subr.bf16.mxu0 0
        %1626 = vmatpush1.bf16.msra.mxu0 0
        %1627 = vmatprep.subr.bf16.mxu0 0
        %1628 = vmatpush1.bf16.msra.mxu0 0
        %1629 = vmatprep.subr.bf16.mxu0 0
        %1630 = vmatpush1.bf16.msra.mxu0 0
        %1631 = vmatprep.subr.bf16.mxu0 0
        %1632 = vmatpush1.bf16.msra.mxu0 0
        %1633 = vmatprep.subr.bf16.mxu0 0
        %1634 = vmatpush1.bf16.msra.mxu0 %v1617
        %1635 = vmatprep.subr.bf16.mxu0 0
        %1636 = vmatpush2.bf16.msra.mxu0 0
        %1637 = vmatprep.subr.bf16.mxu0 0
        %1638 = vmatpush2.bf16.msra.mxu0 0
        %1639 = vmatprep.subr.bf16.mxu0 0
        %1640 = vmatpush2.bf16.msra.mxu0 0
        %1641 = vmatprep.subr.bf16.mxu0 0
        %1642 = vmatpush2.bf16.msra.mxu0 0
        %1643 = vmatprep.subr.bf16.mxu0 0
        %1644 = vmatpush2.bf16.msra.mxu0 0
        %1645 = vmatprep.subr.bf16.mxu0 0
        %1646 = vmatpush2.bf16.msra.mxu0 0
        %1647 = vmatprep.subr.bf16.mxu0 0
        %1648 = vmatpush2.bf16.msra.mxu0 0
        %1649 = vmatprep.subr.bf16.mxu0 0
        %1650 = vmatpush2.bf16.msra.mxu0 0
        %1651 = vmatprep.mubr.bf16.mxu0 0
        %1652 = vmatmul.mubr.bf16.gmra.mxu0 %v1614
        %v1653 = vpop.f32.mrf.mxu0
        %v1654 = vadd.f32 0.0, %v1653
        %v1655 = vpop.f32.mrf.mxu0
        %v1656 = vpop.f32.mrf.mxu0
        %v1657 = vpop.f32.mrf.mxu0
        %1658 = vdwg.mxu0
        %1661 = vrot.lane.b32.xlu0 %v1165, 32
        %v1662 = vpop.permute.xlu0 %1661
        %1663 = vrot.lane.b32.xlu0 %v1214, 32
        %v1664 = vpop.permute.xlu0 %1663
        %1669 = vrot.lane.b32.xlu0 %v1386, 64
        %v1670 = vpop.permute.xlu0 %1669
        %1671 = vrot.lane.b32.xlu0 %v1434, 64
        %v1672 = vpop.permute.xlu0 %1671
        %1677 = vrot.lane.b32.xlu0 %v1606, 96
        %v1678 = vpop.permute.xlu0 %1677
        %1679 = vrot.lane.b32.xlu0 %v1654, 96
        %v1680 = vpop.permute.xlu0 %1679
        %v1683 = vsel %vm782, %v942, %v1662
        %v1684 = vsel %vm782, %v988, %v1664
        %vm1685 = vcmask 523264
        %v1686 = vsel %vm1685, %v1683, %v1670
        %v1687 = vsel %vm1685, %v1684, %v1672
        %vm1688 = vcmask 785408
        %v1689 = vsel %vm1688, %v1686, %v1678
        %v1690 = vsel %vm1688, %v1687, %v1680
        %v1691 = vpack.c.bf16 %v1690, %v1689
        %v1692 = vld [vmem:[%s389] sm:$0xf]
        %v1693 = vld [vmem:[%s389 + $0x4] sm:$0xf]
        %v1694 = vld [vmem:[%s389 + $0x8] sm:$0xf]
        %v1695 = vld [vmem:[%s389 + $0xc] sm:$0xf]
        %v1696 = vld [vmem:[%s389 + $0x10] sm:$0xf]
        %v1697 = vld [vmem:[%s389 + $0x14] sm:$0xf]
        %v1698 = vld [vmem:[%s389 + $0x18] sm:$0xf]
        %v1699 = vld [vmem:[%s389 + $0x1c] sm:$0xf]
        %v1700 = vld [vmem:[%s389 + $0x20] sm:$0xf]
        %v1701 = vld [vmem:[%s389 + $0x24] sm:$0xf]
        %v1702 = vld [vmem:[%s389 + $0x28] sm:$0xf]
        %v1703 = vld [vmem:[%s389 + $0x2c] sm:$0xf]
        %v1704 = vld [vmem:[%s389 + $0x30] sm:$0xf]
        %v1705 = vld [vmem:[%s389 + $0x34] sm:$0xf]
        %v1706 = vld [vmem:[%s389 + $0x38] sm:$0xf]
        %v1707 = vld [vmem:[%s389 + $0x3c] sm:$0xf]
        %v1708 = vlaneseq
        %v1709 = vshrl.u32 %v1708, 7
        %v1710 = vsub.s32 0, %v1709
        %v1711 = vrot.slane %v489, %v1710
        %v1728 = vunpack.c.l.b16 %v1692
        %v1729 = vunpack.c.l.b16 %v1693
        %v1730 = vunpack.c.l.b16 %v1694
        %v1731 = vunpack.c.l.b16 %v1695
        %v1732 = vunpack.c.l.b16 %v1696
        %v1733 = vunpack.c.l.b16 %v1697
        %v1734 = vunpack.c.l.b16 %v1698
        %v1735 = vunpack.c.l.b16 %v1699
        %v1736 = vunpack.c.l.b16 %v1700
        %v1737 = vunpack.c.l.b16 %v1701
        %v1738 = vunpack.c.l.b16 %v1702
        %v1739 = vunpack.c.l.b16 %v1703
        %v1740 = vunpack.c.l.b16 %v1704
        %v1741 = vunpack.c.l.b16 %v1705
        %v1742 = vunpack.c.l.b16 %v1706
        %v1743 = vunpack.c.l.b16 %v1707
        %v1744 = vpack.c.b16 %v1729, %v1728
        %v1745 = vpack.c.b16 %v1731, %v1730
        %v1746 = vpack.c.b16 %v1733, %v1732
        %v1747 = vpack.c.b16 %v1735, %v1734
        %v1748 = vpack.c.b16 %v1737, %v1736
        %v1749 = vpack.c.b16 %v1739, %v1738
        %v1750 = vpack.c.b16 %v1741, %v1740
        %v1751 = vpack.c.b16 %v1743, %v1742
        %1760 = vmatprep.subr.bf16.mxu0 0
        %1761 = vmatpush1.bf16.msra.mxu0 %v1751
        %1762 = vmatprep.subr.bf16.mxu0 0
        %1763 = vmatpush1.bf16.msra.mxu0 %v1750
        %1764 = vmatprep.subr.bf16.mxu0 0
        %1765 = vmatpush1.bf16.msra.mxu0 %v1749
        %1766 = vmatprep.subr.bf16.mxu0 0
        %1767 = vmatpush1.bf16.msra.mxu0 %v1748
        %1768 = vmatprep.subr.bf16.mxu0 0
        %1769 = vmatpush1.bf16.msra.mxu0 %v1747
        %1770 = vmatprep.subr.bf16.mxu0 0
        %1771 = vmatpush1.bf16.msra.mxu0 %v1746
        %1772 = vmatprep.subr.bf16.mxu0 0
        %1773 = vmatpush1.bf16.msra.mxu0 %v1745
        %1774 = vmatprep.subr.bf16.mxu0 0
        %1775 = vmatpush1.bf16.msra.mxu0 %v1744
        %1776 = vmatprep.subr.bf16.mxu0 0
        %1777 = vmatpush2.bf16.msra.mxu0 0
        %1778 = vmatprep.subr.bf16.mxu0 0
        %1779 = vmatpush2.bf16.msra.mxu0 0
        %1780 = vmatprep.subr.bf16.mxu0 0
        %1781 = vmatpush2.bf16.msra.mxu0 0
        %1782 = vmatprep.subr.bf16.mxu0 0
        %1783 = vmatpush2.bf16.msra.mxu0 0
        %1784 = vmatprep.subr.bf16.mxu0 0
        %1785 = vmatpush2.bf16.msra.mxu0 0
        %1786 = vmatprep.subr.bf16.mxu0 0
        %1787 = vmatpush2.bf16.msra.mxu0 0
        %1788 = vmatprep.subr.bf16.mxu0 0
        %1789 = vmatpush2.bf16.msra.mxu0 0
        %1790 = vmatprep.subr.bf16.mxu0 0
        %1791 = vmatpush2.bf16.msra.mxu0 0
        %1792 = vmatprep.mubr.bf16.mxu0 0
        %1793 = vmatmul.mubr.bf16.gmra.mxu0 %v1691
        %v1794 = vpop.f32.mrf.mxu0
        %v1795 = vadd.f32 %v1711, %v1794
        %v1796 = vpop.f32.mrf.mxu0
        %v1797 = vpop.f32.mrf.mxu0
        %v1798 = vadd.f32 %v1711, %v1797
        %v1799 = vpop.f32.mrf.mxu0
        %1800 = vdwg.mxu0
        %v1801 = vadd.f32 %v485, %v1795
        %v1802 = vadd.f32 %v486, %v1798
        %1803 = vadd.xlane.f32.xlu0 %v1801
        %v1804 = vpop.xlane.xlu0 %1803
        %1805 = vadd.xlane.f32.xlu0 %v1802
        %v1806 = vpop.xlane.xlu0 %1805
        %v1807 = vmul.f32 %v1804, %v498
        %v1808 = vmul.f32 %v1806, %v498
        %v1809 = vsub.f32 %v1801, %v1807
        %v1810 = vsub.f32 %v1802, %v1808
        %v1811 = vmul.f32 %v1809, %v1809
        %v1812 = vmul.f32 %v1810, %v1810
        %1813 = vadd.xlane.f32.xlu0 %v1811
        %v1814 = vpop.xlane.xlu0 %1813
        %1815 = vadd.xlane.f32.xlu0 %v1812
        %v1816 = vpop.xlane.xlu0 %1815
        %v1817 = vmul.f32 %v1814, %v498
        %v1818 = vmul.f32 %v1816, %v498
        %v1819 = vadd.f32 %v1817, 1e-05
        %v1820 = vadd.f32 %v1818, 1e-05
        %v1821 = vrsqrt.pop %v1819
        %v1822 = vrsqrt.pop %v1820
        %v1823 = vmul.f32 %v1809, %v1821
        %v1824 = vmul.f32 %v1810, %v1822
        %v1825 = vlaneseq
        %v1826 = vshrl.u32 %v1825, 7
        %v1827 = vsub.s32 0, %v1826
        %v1828 = vrot.slane %v490, %v1827
        %v1829 = vmul.f32 %v1823, %v1828
        %v1830 = vmul.f32 %v1824, %v1828
        %v1831 = vlaneseq
        %v1832 = vshrl.u32 %v1831, 7
        %v1833 = vsub.s32 0, %v1832
        %v1834 = vrot.slane %v491, %v1833
        %v1835 = vadd.f32 %v1829, %v1834
        %v1836 = vadd.f32 %v1830, %v1834
        %v1837 = vpack.c.bf16 %v1836, %v1835
        %v1838 = vld [vmem:[%s398] sm:$0xff]
        %v1839 = vld [vmem:[%s398 + $0x8] sm:$0xff]
        %v1840 = vld [vmem:[%s398 + $0x10] sm:$0xff]
        %v1841 = vld [vmem:[%s398 + $0x18] sm:$0xff]
        %v1842 = vld [vmem:[%s398 + $0x20] sm:$0xff]
        %v1843 = vld [vmem:[%s398 + $0x28] sm:$0xff]
        %v1844 = vld [vmem:[%s398 + $0x30] sm:$0xff]
        %v1845 = vld [vmem:[%s398 + $0x38] sm:$0xff]
        %v1846 = vld [vmem:[%s398 + $0x40] sm:$0xff]
        %v1847 = vld [vmem:[%s398 + $0x48] sm:$0xff]
        %v1848 = vld [vmem:[%s398 + $0x50] sm:$0xff]
        %v1849 = vld [vmem:[%s398 + $0x58] sm:$0xff]
        %v1850 = vld [vmem:[%s398 + $0x60] sm:$0xff]
        %v1851 = vld [vmem:[%s398 + $0x68] sm:$0xff]
        %v1852 = vld [vmem:[%s398 + $0x70] sm:$0xff]
        %v1853 = vld [vmem:[%s398 + $0x78] sm:$0xff]
        %v1855 = vlaneseq
        %v1856 = vshrl.u32 %v1855, 7
        %v1857 = vsub.s32 0, %v1856
        %v1858 = vrot.slane %v493, %v1857
        %v1859 = vlaneseq
        %v1860 = vshrl.u32 %v1859, 7
        %v1861 = vsub.s32 1, %v1860
        %v1862 = vrot.slane %v493, %v1861
        %v1881 = vunpack.c.l.b16 %v1838
        %v1882 = vunpack.c.h.b16 %v1838
        %v1883 = vunpack.c.l.b16 %v1839
        %v1884 = vunpack.c.h.b16 %v1839
        %v1885 = vunpack.c.l.b16 %v1840
        %v1886 = vunpack.c.h.b16 %v1840
        %v1887 = vunpack.c.l.b16 %v1841
        %v1888 = vunpack.c.h.b16 %v1841
        %v1889 = vunpack.c.l.b16 %v1842
        %v1890 = vunpack.c.h.b16 %v1842
        %v1891 = vunpack.c.l.b16 %v1843
        %v1892 = vunpack.c.h.b16 %v1843
        %v1893 = vunpack.c.l.b16 %v1844
        %v1894 = vunpack.c.h.b16 %v1844
        %v1895 = vunpack.c.l.b16 %v1845
        %v1896 = vunpack.c.h.b16 %v1845
        %v1897 = vunpack.c.l.b16 %v1846
        %v1898 = vunpack.c.h.b16 %v1846
        %v1899 = vunpack.c.l.b16 %v1847
        %v1900 = vunpack.c.h.b16 %v1847
        %v1901 = vunpack.c.l.b16 %v1848
        %v1902 = vunpack.c.h.b16 %v1848
        %v1903 = vunpack.c.l.b16 %v1849
        %v1904 = vunpack.c.h.b16 %v1849
        %v1905 = vunpack.c.l.b16 %v1850
        %v1906 = vunpack.c.h.b16 %v1850
        %v1907 = vunpack.c.l.b16 %v1851
        %v1908 = vunpack.c.h.b16 %v1851
        %v1909 = vunpack.c.l.b16 %v1852
        %v1910 = vunpack.c.h.b16 %v1852
        %v1911 = vunpack.c.l.b16 %v1853
        %v1912 = vunpack.c.h.b16 %v1853
        %v1913 = vpack.c.b16 %v1883, %v1881
        %v1914 = vpack.c.b16 %v1884, %v1882
        %v1915 = vpack.c.b16 %v1887, %v1885
        %v1916 = vpack.c.b16 %v1888, %v1886
        %v1917 = vpack.c.b16 %v1891, %v1889
        %v1918 = vpack.c.b16 %v1892, %v1890
        %v1919 = vpack.c.b16 %v1895, %v1893
        %v1920 = vpack.c.b16 %v1896, %v1894
        %v1921 = vpack.c.b16 %v1899, %v1897
        %v1922 = vpack.c.b16 %v1900, %v1898
        %v1923 = vpack.c.b16 %v1903, %v1901
        %v1924 = vpack.c.b16 %v1904, %v1902
        %v1925 = vpack.c.b16 %v1907, %v1905
        %v1926 = vpack.c.b16 %v1908, %v1906
        %v1927 = vpack.c.b16 %v1911, %v1909
        %v1928 = vpack.c.b16 %v1912, %v1910
        %1945 = vmatprep.subr.bf16.mxu0 %v1928
        %1946 = vmatpush1.bf16.msra.mxu0 %v1927
        %1947 = vmatprep.subr.bf16.mxu0 %v1926
        %1948 = vmatpush1.bf16.msra.mxu0 %v1925
        %1949 = vmatprep.subr.bf16.mxu0 %v1924
        %1950 = vmatpush1.bf16.msra.mxu0 %v1923
        %1951 = vmatprep.subr.bf16.mxu0 %v1922
        %1952 = vmatpush1.bf16.msra.mxu0 %v1921
        %1953 = vmatprep.subr.bf16.mxu0 %v1920
        %1954 = vmatpush1.bf16.msra.mxu0 %v1919
        %1955 = vmatprep.subr.bf16.mxu0 %v1918
        %1956 = vmatpush1.bf16.msra.mxu0 %v1917
        %1957 = vmatprep.subr.bf16.mxu0 %v1916
        %1958 = vmatpush1.bf16.msra.mxu0 %v1915
        %1959 = vmatprep.subr.bf16.mxu0 %v1914
        %1960 = vmatpush1.bf16.msra.mxu0 %v1913
        %1961 = vmatprep.subr.bf16.mxu0 0
        %1962 = vmatpush2.bf16.msra.mxu0 0
        %1963 = vmatprep.subr.bf16.mxu0 0
        %1964 = vmatpush2.bf16.msra.mxu0 0
        %1965 = vmatprep.subr.bf16.mxu0 0
        %1966 = vmatpush2.bf16.msra.mxu0 0
        %1967 = vmatprep.subr.bf16.mxu0 0
        %1968 = vmatpush2.bf16.msra.mxu0 0
        %1969 = vmatprep.subr.bf16.mxu0 0
        %1970 = vmatpush2.bf16.msra.mxu0 0
        %1971 = vmatprep.subr.bf16.mxu0 0
        %1972 = vmatpush2.bf16.msra.mxu0 0
        %1973 = vmatprep.subr.bf16.mxu0 0
        %1974 = vmatpush2.bf16.msra.mxu0 0
        %1975 = vmatprep.subr.bf16.mxu0 0
        %1976 = vmatpush2.bf16.msra.mxu0 0
        %1977 = vmatprep.mubr.bf16.mxu0 0
        %1978 = vmatmul.mubr.bf16.gmra.mxu0 %v1837
        %v1979 = vpop.f32.mrf.mxu0
        %v1980 = vadd.f32 %v1858, %v1979
        %v1981 = vpop.f32.mrf.mxu0
        %v1982 = vadd.f32 %v1862, %v1981
        %v1983 = vpop.f32.mrf.mxu0
        %v1984 = vadd.f32 %v1858, %v1983
        %v1985 = vpop.f32.mrf.mxu0
        %v1986 = vadd.f32 %v1862, %v1985
        %1987 = vdwg.mxu0
        %v1988 = vmul.f32 %v1980, 0.5
        %v1989 = vmul.f32 %v1982, 0.5
        %v1990 = vmul.f32 %v1984, 0.5
        %v1991 = vmul.f32 %v1986, 0.5
        %v1992 = vmul.f32 %v1980, 0.044715
        %v1993 = vmul.f32 %v1982, 0.044715
        %v1994 = vmul.f32 %v1984, 0.044715
        %v1995 = vmul.f32 %v1986, 0.044715
        %v1996 = vmul.f32 %v1992, %v1980
        %v1997 = vmul.f32 %v1993, %v1982
        %v1998 = vmul.f32 %v1994, %v1984
        %v1999 = vmul.f32 %v1995, %v1986
        %v2000 = vmul.f32 %v1996, %v1980
        %v2001 = vmul.f32 %v1997, %v1982
        %v2002 = vmul.f32 %v1998, %v1984
        %v2003 = vmul.f32 %v1999, %v1986
        %v2004 = vadd.f32 %v1980, %v2000
        %v2005 = vadd.f32 %v1982, %v2001
        %v2006 = vadd.f32 %v1984, %v2002
        %v2007 = vadd.f32 %v1986, %v2003
        %v2008 = vmul.f32 %v2004, 0.7978846
        %v2009 = vmul.f32 %v2005, 0.7978846
        %v2010 = vmul.f32 %v2006, 0.7978846
        %v2011 = vmul.f32 %v2007, 0.7978846
        %v2012 = vtanh.pop %v2008
        %v2013 = vtanh.pop %v2009
        %v2014 = vtanh.pop %v2010
        %v2015 = vtanh.pop %v2011
        %v2016 = vadd.f32 %v2012, 1.0
        %v2017 = vadd.f32 %v2013, 1.0
        %v2018 = vadd.f32 %v2014, 1.0
        %v2019 = vadd.f32 %v2015, 1.0
        %v2020 = vmul.f32 %v1988, %v2016
        %v2021 = vmul.f32 %v1989, %v2017
        %v2022 = vmul.f32 %v1990, %v2018
        %v2023 = vmul.f32 %v1991, %v2019
        %v2024 = vpack.c.bf16 %v2022, %v2020
        %v2025 = vpack.c.bf16 %v2023, %v2021
        %v2026 = vld [vmem:[%s407] sm:$0xf]
        %v2027 = vld [vmem:[%s407 + $0x4] sm:$0xf]
        %v2028 = vld [vmem:[%s407 + $0x8] sm:$0xf]
        %v2029 = vld [vmem:[%s407 + $0xc] sm:$0xf]
        %v2030 = vld [vmem:[%s407 + $0x10] sm:$0xf]
        %v2031 = vld [vmem:[%s407 + $0x14] sm:$0xf]
        %v2032 = vld [vmem:[%s407 + $0x18] sm:$0xf]
        %v2033 = vld [vmem:[%s407 + $0x1c] sm:$0xf]
        %v2034 = vld [vmem:[%s407 + $0x20] sm:$0xf]
        %v2035 = vld [vmem:[%s407 + $0x24] sm:$0xf]
        %v2036 = vld [vmem:[%s407 + $0x28] sm:$0xf]
        %v2037 = vld [vmem:[%s407 + $0x2c] sm:$0xf]
        %v2038 = vld [vmem:[%s407 + $0x30] sm:$0xf]
        %v2039 = vld [vmem:[%s407 + $0x34] sm:$0xf]
        %v2040 = vld [vmem:[%s407 + $0x38] sm:$0xf]
        %v2041 = vld [vmem:[%s407 + $0x3c] sm:$0xf]
        %v2042 = vld [vmem:[%s407 + $0x40] sm:$0xf]
        %v2043 = vld [vmem:[%s407 + $0x44] sm:$0xf]
        %v2044 = vld [vmem:[%s407 + $0x48] sm:$0xf]
        %v2045 = vld [vmem:[%s407 + $0x4c] sm:$0xf]
        %v2046 = vld [vmem:[%s407 + $0x50] sm:$0xf]
        %v2047 = vld [vmem:[%s407 + $0x54] sm:$0xf]
        %v2048 = vld [vmem:[%s407 + $0x58] sm:$0xf]
        %v2049 = vld [vmem:[%s407 + $0x5c] sm:$0xf]
        %v2050 = vld [vmem:[%s407 + $0x60] sm:$0xf]
        %v2051 = vld [vmem:[%s407 + $0x64] sm:$0xf]
        %v2052 = vld [vmem:[%s407 + $0x68] sm:$0xf]
        %v2053 = vld [vmem:[%s407 + $0x6c] sm:$0xf]
        %v2054 = vld [vmem:[%s407 + $0x70] sm:$0xf]
        %v2055 = vld [vmem:[%s407 + $0x74] sm:$0xf]
        %v2056 = vld [vmem:[%s407 + $0x78] sm:$0xf]
        %v2057 = vld [vmem:[%s407 + $0x7c] sm:$0xf]
        %v2058 = vlaneseq
        %v2059 = vshrl.u32 %v2058, 7
        %v2060 = vsub.s32 0, %v2059
        %v2061 = vrot.slane %v492, %v2060
        %v2094 = vunpack.c.l.b16 %v2026
        %v2095 = vunpack.c.l.b16 %v2027
        %v2096 = vunpack.c.l.b16 %v2028
        %v2097 = vunpack.c.l.b16 %v2029
        %v2098 = vunpack.c.l.b16 %v2030
        %v2099 = vunpack.c.l.b16 %v2031
        %v2100 = vunpack.c.l.b16 %v2032
        %v2101 = vunpack.c.l.b16 %v2033
        %v2102 = vunpack.c.l.b16 %v2034
        %v2103 = vunpack.c.l.b16 %v2035
        %v2104 = vunpack.c.l.b16 %v2036
        %v2105 = vunpack.c.l.b16 %v2037
        %v2106 = vunpack.c.l.b16 %v2038
        %v2107 = vunpack.c.l.b16 %v2039
        %v2108 = vunpack.c.l.b16 %v2040
        %v2109 = vunpack.c.l.b16 %v2041
        %v2110 = vunpack.c.l.b16 %v2042
        %v2111 = vunpack.c.l.b16 %v2043
        %v2112 = vunpack.c.l.b16 %v2044
        %v2113 = vunpack.c.l.b16 %v2045
        %v2114 = vunpack.c.l.b16 %v2046
        %v2115 = vunpack.c.l.b16 %v2047
        %v2116 = vunpack.c.l.b16 %v2048
        %v2117 = vunpack.c.l.b16 %v2049
        %v2118 = vunpack.c.l.b16 %v2050
        %v2119 = vunpack.c.l.b16 %v2051
        %v2120 = vunpack.c.l.b16 %v2052
        %v2121 = vunpack.c.l.b16 %v2053
        %v2122 = vunpack.c.l.b16 %v2054
        %v2123 = vunpack.c.l.b16 %v2055
        %v2124 = vunpack.c.l.b16 %v2056
        %v2125 = vunpack.c.l.b16 %v2057
        %v2126 = vpack.c.b16 %v2095, %v2094
        %v2127 = vpack.c.b16 %v2097, %v2096
        %v2128 = vpack.c.b16 %v2099, %v2098
        %v2129 = vpack.c.b16 %v2101, %v2100
        %v2130 = vpack.c.b16 %v2103, %v2102
        %v2131 = vpack.c.b16 %v2105, %v2104
        %v2132 = vpack.c.b16 %v2107, %v2106
        %v2133 = vpack.c.b16 %v2109, %v2108
        %v2134 = vpack.c.b16 %v2111, %v2110
        %v2135 = vpack.c.b16 %v2113, %v2112
        %v2136 = vpack.c.b16 %v2115, %v2114
        %v2137 = vpack.c.b16 %v2117, %v2116
        %v2138 = vpack.c.b16 %v2119, %v2118
        %v2139 = vpack.c.b16 %v2121, %v2120
        %v2140 = vpack.c.b16 %v2123, %v2122
        %v2141 = vpack.c.b16 %v2125, %v2124
        %2158 = vmatprep.subr.bf16.mxu0 0
        %2159 = vmatpush1.bf16.msra.mxu0 %v2133
        %2160 = vmatprep.subr.bf16.mxu0 0
        %2161 = vmatpush1.bf16.msra.mxu0 %v2132
        %2162 = vmatprep.subr.bf16.mxu0 0
        %2163 = vmatpush1.bf16.msra.mxu0 %v2131
        %2164 = vmatprep.subr.bf16.mxu0 0
        %2165 = vmatpush1.bf16.msra.mxu0 %v2130
        %2166 = vmatprep.subr.bf16.mxu0 0
        %2167 = vmatpush1.bf16.msra.mxu0 %v2129
        %2168 = vmatprep.subr.bf16.mxu0 0
        %2169 = vmatpush1.bf16.msra.mxu0 %v2128
        %2170 = vmatprep.subr.bf16.mxu0 0
        %2171 = vmatpush1.bf16.msra.mxu0 %v2127
        %2172 = vmatprep.subr.bf16.mxu0 0
        %2173 = vmatpush1.bf16.msra.mxu0 %v2126
        %2174 = vmatprep.subr.bf16.mxu0 0
        %2175 = vmatpush2.bf16.msra.mxu0 %v2141
        %2176 = vmatprep.subr.bf16.mxu0 0
        %2177 = vmatpush2.bf16.msra.mxu0 %v2140
        %2178 = vmatprep.subr.bf16.mxu0 0
        %2179 = vmatpush2.bf16.msra.mxu0 %v2139
        %2180 = vmatprep.subr.bf16.mxu0 0
        %2181 = vmatpush2.bf16.msra.mxu0 %v2138
        %2182 = vmatprep.subr.bf16.mxu0 0
        %2183 = vmatpush2.bf16.msra.mxu0 %v2137
        %2184 = vmatprep.subr.bf16.mxu0 0
        %2185 = vmatpush2.bf16.msra.mxu0 %v2136
        %2186 = vmatprep.subr.bf16.mxu0 0
        %2187 = vmatpush2.bf16.msra.mxu0 %v2135
        %2188 = vmatprep.subr.bf16.mxu0 0
        %2189 = vmatpush2.bf16.msra.mxu0 %v2134
        %2190 = vmatprep.mubr.bf16.mxu0 %v2025
        %2191 = vmatmul.mubr.bf16.gmra.mxu0 %v2024
        %v2192 = vpop.f32.mrf.mxu0
        %v2193 = vadd.f32 %v2061, %v2192
        %v2194 = vpop.f32.mrf.mxu0
        %v2195 = vpop.f32.mrf.mxu0
        %v2196 = vadd.f32 %v2061, %v2195
        %v2197 = vpop.f32.mrf.mxu0
        %2198 = vdwg.mxu0
        %v2199 = vadd.f32 %v1801, %v2193
        %v2200 = vadd.f32 %v1802, %v2196
        %2201 = vst [vmem:[#allocation10] sm:$0xff] %v2199
        %2202 = vst [vmem:[#allocation10 + $0x8] sm:$0xff] %v2200
        // Predicated region
        $region69: #{tpu_custom_call.1} parent=47 // pred_check
          %p2203 = pneg %p240
        $region70: #{tpu_custom_call.1} parent=47 // pred_check_branch
          %2205 = sbr.rel (%p2203) target = $region72
        $region71: #{tpu_custom_call.1} parent=47 // pred_region
          %s2206 = smul.u32 2, %s32
          %s2208 = ssub.s32 256, 256
          %2209 = vsyncadd [#allocation4], %s2208
          %s2210 = smul.addr %s2206, 128
          %s2211 = scalar_lea.hbm %s7, %s2210
          %s2212 = sshll.u32 [#allocation10], 4
          %s2213 = int_to_ptr.vmem [resolvable:$true] %s2212
          %2218 = dma.vmem_to_hbm [thread:$0]  %s2213, 256, %s2211, [#allocation4], 128, 128, 8
        $region72: #{tpu_custom_call.1} parent=47 // pred_fallthru
          _
        // Predicated region
        $region73: #{tpu_custom_call.1} parent=47 // pred_check
          %p2219 = pneg %p240
        $region74: #{tpu_custom_call.1} parent=47 // pred_check_branch
          %2221 = sbr.rel (%p2219) target = $region76
        $region75: #{tpu_custom_call.1} parent=47 // pred_region
          %2222 = dma.done [#allocation4], 256
        $region76: #{tpu_custom_call.1} parent=47 // pred_fallthru
          _
      $region48: #{tpu_custom_call.1} parent=5 // pred_fallthru
        _
      %p2223 = scmp.le.s32.totalorder 2, %s23
      // Predicated region
      $region77: #{tpu_custom_call.1} parent=5 // pred_check
        %p2224 = pneg %p2223
      $region78: #{tpu_custom_call.1} parent=5 // pred_check_branch
        %2226 = sbr.rel (%p2224) target = $region80
      $region79: #{tpu_custom_call.1} parent=5 // pred_region
        %s2227 = ssub.s32 %s23, 2
      $region80: #{tpu_custom_call.1} parent=5 // pred_fallthru
        _
    $region6: #{tpu_custom_call.1} parent=1 // loop_footer
      %s27 = sadd.s32 1, %s23
    $region7: #{tpu_custom_call.1} parent=1 // loop_footer_branch
      %22 = sbr.rel target = $region3
    $region8: #{tpu_custom_call.1} parent=1 // loop_exit
      _
    %2228 = vsyncpa [#allocation3], 1
    %s2229 = scalar_lea.sflag [#allocation3], 1
    %2230 = vsyncpa %s2229, 1
    %2231 = vsyncpa [#allocation6], 1
    %s2232 = scalar_lea.sflag [#allocation6], 1
    %2233 = vsyncpa %s2232, 1
    %2234 = vsyncpa [#allocation9], 1
    %s2235 = scalar_lea.sflag [#allocation9], 1
    %2236 = vsyncpa %s2235, 1
    %2237 = vsyncpa [#allocation4], 1
    %s2238 = scalar_lea.sflag [#allocation4], 1
    %2239 = vsyncpa %s2238, 1

</llo_original>
